<compile_context>
chip_gen: v5e
topology: v5e:2x2
jax: 0.10.0
libtpu: 0.0.40
codegen_flags: <defaults>
</compile_context>

<pallas_src>
import functools
from math import floor

import jax
import jax.numpy as jnp
from jax.experimental import pallas as pl
from jax.experimental.pallas import tpu as pltpu

LANES = 128
COMPUTE_DTYPE = jnp.bfloat16   # MXU-native; accumulation & epilogues stay f32 (v5e-safe).


def _round_up(x, m):
    return (x + m - 1) // m * m


def _conv_out(h, k, s):
    return floor((h - (k - 1) - 1) / s + 1)


# ---------------- im2col glue (single XLA op, no Python loops) ----------------

def _extract_patches(x, k, s, nchw):
    """Patches for a VALID, stride-s, kxk conv. Output (B, Ho, Wo, C*k*k) with feature
    order (C, kh, kw) (channel-major), matching PyTorch weight.reshape(C_out, C_in*k*k)."""
    dn = ("NCHW", "HWIO", "NHWC") if nchw else ("NHWC", "HWIO", "NHWC")
    return jax.lax.conv_general_dilated_patches(
        x, filter_shape=(k, k), window_strides=(s, s), padding="VALID",
        dimension_numbers=dn)


# ---------------- Pallas kernels ----------------

def _conv_pair_kernel(x_ref, w_ref, b_ref, o_ref):
    """One (stream, M-tile) grid point: relu(x @ w + b)."""
    y = jnp.dot(x_ref[0], w_ref[0], preferred_element_type=jnp.float32)
    y = jnp.maximum(y + b_ref[0], 0.0)
    o_ref[0] = y.astype(o_ref.dtype)


def conv_pair_matmul(x, w, b):
    """x: (S, M, K) im2col patches (compute dtype); w: (S, K, N); b: (S, 1, N) f32.
    Returns relu(x @ w + b) as (S, M, N) on an (S, M-tiles) grid. M is NOT padded:
    the ragged tail block is masked by Pallas, so no extra HBM pass over the patches."""
    S, M, K = x.shape
    N = w.shape[2]
    bm = min(1024, _round_up(M, 16))           # 16-row alignment (bf16 sublane packing)
    grid_m = pl.cdiv(M, bm)
    flops = 2 * S * M * K * N
    bytes_accessed = int(x.size * x.dtype.itemsize + w.size * w.dtype.itemsize
                         + b.size * 4 + S * M * N * x.dtype.itemsize)
    return pl.pallas_call(
        _conv_pair_kernel,
        out_shape=jax.ShapeDtypeStruct((S, M, N), x.dtype),
        grid=(S, grid_m),
        in_specs=[pl.BlockSpec((1, bm, K), lambda s, i: (s, i, 0)),
                  pl.BlockSpec((1, K, N), lambda s, i: (s, 0, 0)),
                  pl.BlockSpec((1, 1, N), lambda s, i: (s, 0, 0))],
        out_specs=pl.BlockSpec((1, bm, N), lambda s, i: (s, i, 0)),
        compiler_params=pltpu.CompilerParams(
            dimension_semantics=("parallel", "parallel")),
        cost_estimate=pl.CostEstimate(flops=flops, transcendentals=0,
                                      bytes_accessed=bytes_accessed),
    )(x, w, b)


def _mlp_heads_kernel(m_ref, s_ref, ns_ref, wns_ref, bns_ref,
                      whm_ref, whs_ref, whn_ref, bh_ref,
                      wo_ref, bo_ref, amask_ref, asel_ref, o_ref, *, compute_dtype):
    # nonspatial dense + tanh (f32 accumulate, f32 epilogue)
    n = jnp.tanh(jnp.dot(ns_ref[...], wns_ref[...],
                         preferred_element_type=jnp.float32) + bns_ref[...])
    # hidden layer on the (minimap, screen, nonspatial) feature concat as 3 partial matmuls;
    # hid_w_m / hid_w_s rows were permuted at init so the NHWC-flat conv2 output is consumed
    # directly (no runtime channel-major transpose).
    h = jnp.dot(m_ref[...], whm_ref[...], preferred_element_type=jnp.float32)
    h = h + jnp.dot(s_ref[...], whs_ref[...], preferred_element_type=jnp.float32)
    h = h + jnp.dot(n.astype(compute_dtype), whn_ref[...],
                    preferred_element_type=jnp.float32)
    h = jnp.maximum(h + bh_ref[...], 0.0)
    # all six heads as one lane-dense matmul into a padded column slab
    y = jnp.dot(h.astype(compute_dtype), wo_ref[...],
                preferred_element_type=jnp.float32) + bo_ref[...]
    # policy-mask epilogue: masked mul + row-sum + normalize on the action columns only.
    # TODO(synk): the reference divides the raw logits by their masked sum (no softmax, no
    # epsilon); a zero masked sum misbehaves exactly like the PyTorch module (here via the
    # EUP reciprocal instead of a VPU divide).
    masked = y * amask_ref[...]
    denom = jnp.sum(masked, axis=1, keepdims=True)
    inv = pl.reciprocal(denom, approx=True)
    o_ref[...] = jnp.where(asel_ref[...] > 0.0, masked * inv, y)


def fused_mlp_heads(m, s, ns, p, act_mask):
    """Fused: tanh(ns @ Wns) -> relu([m,s,n] @ Whid) -> all heads -> policy mask. One call."""
    B, F = m.shape
    Dns = ns.shape[1]
    Nh = p["heads_w"].shape[1]
    # bm=128 so batches >=256 expose >=2 parallel grid steps (v7x's 2 TensorCores);
    # for small B the single partial block is masked by Pallas (no batch padding needed).
    bm = min(128, _round_up(B, 16))
    grid_b = pl.cdiv(B, bm)
    row = lambda r, c: pl.BlockSpec((r, c), lambda i: (i, 0))
    rep = lambda r, c: pl.BlockSpec((r, c), lambda i: (0, 0))
    flops = 2 * B * (Dns * 256 + 2 * F * 256 + 256 * 256 + 256 * Nh)
    bytes_accessed = int(2 * (B * (2 * F + Dns) + 256 * (Dns + 2 * F + 256 + Nh))
                         + 4 * B * Nh)
    kernel = functools.partial(_mlp_heads_kernel, compute_dtype=m.dtype)
    return pl.pallas_call(
        kernel,
        out_shape=jax.ShapeDtypeStruct((B, Nh), jnp.float32),
        grid=(grid_b,),
        in_specs=[row(bm, F), row(bm, F), row(bm, Dns),
                  rep(Dns, 256), rep(1, 256),
                  rep(F, 256), rep(F, 256), rep(256, 256), rep(1, 256),
                  rep(256, Nh), rep(1, Nh), rep(1, Nh), rep(1, Nh)],
        out_specs=row(bm, Nh),
        compiler_params=pltpu.CompilerParams(dimension_semantics=("parallel",)),
        cost_estimate=pl.CostEstimate(flops=flops, transcendentals=B * 256,
                                      bytes_accessed=bytes_accessed),
    )(m, s, ns, p["ns_w"], p["ns_b"], p["hid_w_m"], p["hid_w_s"], p["hid_w_n"],
      p["hid_b"], p["heads_w"], p["heads_b"], act_mask, p["act_sel"])


# ---------------- parameters (xavier-uniform / zero bias, pre-packed for the kernels) ----------------

def _xavier_uniform(key, shape, fan_in, fan_out):
    bound = (6.0 / (fan_in + fan_out)) ** 0.5
    return jax.random.uniform(key, shape, jnp.float32, -bound, bound)


def make_atari_net(key, minimap_channels, screen_channels, screen_resolution,
                   nonspatial_obs_dim, num_action, compute_dtype=COMPUTE_DTYPE):
    keys = jax.random.split(key, 12)
    h2 = _conv_out(_conv_out(screen_resolution[0], 8, 4), 4, 2)
    w2 = _conv_out(_conv_out(screen_resolution[1], 8, 4), 4, 2)
    P = h2 * w2
    conv_feat = 32 * P
    res0, res1 = screen_resolution
    A = num_action
    cdt = compute_dtype
    same_conv1 = (minimap_channels == screen_channels)

    def conv_mat(k_, c_out, c_in, ksz):
        w4 = _xavier_uniform(k_, (c_out, c_in, ksz, ksz), c_in * ksz * ksz, c_out * ksz * ksz)
        return w4.reshape(c_out, c_in * ksz * ksz).T.astype(cdt)   # (K, c_out), rows = (C_in, kh, kw)

    p = {}
    m1 = conv_mat(keys[0], 16, minimap_channels, 8)
    s1 = conv_mat(keys[2], 16, screen_channels, 8)
    b16 = jnp.zeros((1, 16), jnp.float32)
    if same_conv1:
        p["conv1_w"] = jnp.stack([m1, s1])                    # (2, K1, 16)
        p["conv1_b"] = jnp.stack([b16, b16])                  # (2, 1, 16)
    else:
        p["m_conv1_w"], p["m_conv1_b"] = m1[None], b16[None]
        p["s_conv1_w"], p["s_conv1_b"] = s1[None], b16[None]
    m2 = conv_mat(keys[1], 32, 16, 4)
    s2 = conv_mat(keys[3], 32, 16, 4)
    b32 = jnp.zeros((1, 32), jnp.float32)
    p["conv2_w"] = jnp.stack([m2, s2])                        # (2, 256, 32)
    p["conv2_b"] = jnp.stack([b32, b32])

    # nonspatial dense, K padded to a lane multiple (aligned MXU operand; zero rows are free)
    dns_pad = _round_up(nonspatial_obs_dim, LANES)
    ns_w = _xavier_uniform(keys[4], (nonspatial_obs_dim, 256), nonspatial_obs_dim, 256)
    p["ns_w"] = jnp.pad(ns_w, ((0, dns_pad - nonspatial_obs_dim), (0, 0))).astype(cdt)
    p["ns_b"] = jnp.zeros((1, 256), jnp.float32)

    # TODO(synk): the original declares layer_hidden = Linear(32*h*w + 256, 256) but its forward
    # concatenates minimap + screen + nonspatial (torch.cat default dim=0 cannot type-check);
    # we use the consistent feature-dim concat, so hid_in = 2*32*h*w + 256.
    hid_in = 2 * conv_feat + 256
    hid_w = _xavier_uniform(keys[5], (hid_in, 256), hid_in, 256)   # rows in PyTorch NCHW-flat order

    def nchw_rows_to_nhwc_rows(w_pt):
        # PyTorch flatten order: f_pt = c*P + p   ->   NHWC-flat order: f = p*32 + c.
        # Folding this permutation into the weights removes the runtime activation transpose.
        return w_pt.reshape(32, P, 256).transpose(1, 0, 2).reshape(P * 32, 256)

    p["hid_w_m"] = nchw_rows_to_nhwc_rows(hid_w[:conv_feat]).astype(cdt)
    p["hid_w_s"] = nchw_rows_to_nhwc_rows(hid_w[conv_feat:2 * conv_feat]).astype(cdt)
    p["hid_w_n"] = hid_w[2 * conv_feat:].astype(cdt)
    p["hid_b"] = jnp.zeros((1, 256), jnp.float32)
    # PyTorch-ordered copies kept (f32) only so the in-file reference can validate the permutation.
    p["_ref_hid_w_m_pt"] = hid_w[:conv_feat]
    p["_ref_hid_w_s_pt"] = hid_w[conv_feat:2 * conv_feat]

    head_ws = [_xavier_uniform(keys[6], (256, 1), 256, 1),
               _xavier_uniform(keys[7], (256, A), 256, A),
               _xavier_uniform(keys[8], (256, res0), 256, res0),
               _xavier_uniform(keys[9], (256, res1), 256, res1),
               _xavier_uniform(keys[10], (256, res0), 256, res0),
               _xavier_uniform(keys[11], (256, res1), 256, res1)]
    heads_w = jnp.concatenate(head_ws, axis=1)                # cols = [v | act | s1x | s1y | s2x | s2y]
    nh = heads_w.shape[1]
    nh_pad = _round_up(nh, LANES)
    p["heads_w"] = jnp.pad(heads_w, ((0, 0), (0, nh_pad - nh))).astype(cdt)
    p["heads_b"] = jnp.zeros((1, nh_pad), jnp.float32)
    p["act_sel"] = jnp.zeros((1, nh_pad), jnp.float32).at[0, 1:1 + A].set(1.0)

    def forward(params, obs_minimap, obs_screen, obs_nonspatial, valid_actions):
        B = obs_minimap.shape[0]
        # ---- conv1, both streams fused in one gridded Pallas matmul+bias+relu ----
        if same_conv1:
            # one im2col for both streams (concat on batch is a copy of the small raw input,
            # not of the 4x-larger patch slab)
            x_both = jnp.concatenate([obs_minimap, obs_screen], axis=0).astype(cdt)
            pp = _extract_patches(x_both, 8, 4, nchw=True)                 # (2B,H1,W1,C*64)
            H1, W1 = pp.shape[1], pp.shape[2]
            M1 = B * H1 * W1
            y1 = conv_pair_matmul(pp.reshape(2, M1, -1),
                                  params["conv1_w"], params["conv1_b"])    # (2, M1, 16)
        else:
            pm = _extract_patches(obs_minimap.astype(cdt), 8, 4, nchw=True)
            ps = _extract_patches(obs_screen.astype(cdt), 8, 4, nchw=True)
            H1, W1 = pm.shape[1], pm.shape[2]
            M1 = B * H1 * W1
            ym = conv_pair_matmul(pm.reshape(1, M1, -1),
                                  params["m_conv1_w"], params["m_conv1_b"])
            ys = conv_pair_matmul(ps.reshape(1, M1, -1),
                                  params["s_conv1_w"], params["s_conv1_b"])
            y1 = jnp.concatenate([ym, ys], axis=0)
        y1 = y1.reshape(2 * B, H1, W1, 16)                                 # free reshape, NHWC
        # ---- conv2, both streams in one call (activations stay NHWC, no transposes) ----
        p2 = _extract_patches(y1, 4, 2, nchw=False)                        # (2B,H2,W2,256)
        H2, W2 = p2.shape[1], p2.shape[2]
        M2 = B * H2 * W2
        y2 = conv_pair_matmul(p2.reshape(2, M2, 16 * 16),
                              params["conv2_w"], params["conv2_b"])        # (2, M2, 32)
        # NHWC-flat view (the flatten permutation lives in hid_w_m/hid_w_s) — free reshapes
        m_flat = y2[0].reshape(B, H2 * W2 * 32)
        s_flat = y2[1].reshape(B, H2 * W2 * 32)
        # ---- fused nonspatial + hidden + all heads + policy-mask epilogue ----
        ns = obs_nonspatial.astype(cdt)
        if dns_pad != ns.shape[1]:
            ns = jnp.pad(ns, ((0, 0), (0, dns_pad - ns.shape[1])))
        act_mask = jnp.zeros((1, nh_pad), jnp.float32).at[0, 1:1 + A].set(
            valid_actions.astype(jnp.float32))
        heads = fused_mlp_heads(m_flat, s_flat, ns, params, act_mask)      # (B, nh_pad)
        v = heads[:, 0:1]
        pol = heads[:, 1:1 + A]
        o = 1 + A
        s1x = heads[:, o:o + res0]; o += res0
        s1y = heads[:, o:o + res1]; o += res1
        s2x = heads[:, o:o + res0]; o += res0
        s2y = heads[:, o:o + res1]
        return v, pol, s1x, s1y, s2x, s2y

    return p, jax.jit(forward)


# ---------------- pure-JAX reference (PyTorch layout: channel-major flatten + unpermuted weights) ----------------

def _ref_conv_stream(x, w1, b1, w2, b2):
    f32 = jnp.float32
    B = x.shape[0]
    p1 = _extract_patches(x.astype(f32), 8, 4, nchw=True)
    y1 = jnp.maximum(jnp.einsum("bhwk,kn->bhwn", p1, w1.astype(f32)) + b1[0], 0.0)
    p2 = _extract_patches(y1, 4, 2, nchw=False)
    y2 = jnp.maximum(jnp.einsum("bhwk,kn->bhwn", p2, w2.astype(f32)) + b2[0], 0.0)
    return y2.transpose(0, 3, 1, 2).reshape(B, -1)      # channel-major (NCHW) flatten, as PyTorch


def _reference_forward(p, obs_minimap, obs_screen, obs_nonspatial, valid_actions, A, res0, res1):
    f32 = jnp.float32
    if "conv1_w" in p:
        w1m, w1s, b1m, b1s = p["conv1_w"][0], p["conv1_w"][1], p["conv1_b"][0], p["conv1_b"][1]
    else:
        w1m, b1m = p["m_conv1_w"][0], p["m_conv1_b"][0]
        w1s, b1s = p["s_conv1_w"][0], p["s_conv1_b"][0]
    m = _ref_conv_stream(obs_minimap, w1m, b1m, p["conv2_w"][0], p["conv2_b"][0])
    s = _ref_conv_stream(obs_screen, w1s, b1s, p["conv2_w"][1], p["conv2_b"][1])
    dns = obs_nonspatial.shape[1]
    n = jnp.tanh(obs_nonspatial.astype(f32) @ p["ns_w"][:dns].astype(f32) + p["ns_b"])
    state = jnp.maximum(m @ p["_ref_hid_w_m_pt"] + s @ p["_ref_hid_w_s_pt"]
                        + n @ p["hid_w_n"].astype(f32) + p["hid_b"], 0.0)
    y = state @ p["heads_w"].astype(f32) + p["heads_b"]
    v = y[:, 0:1]
    pol = y[:, 1:1 + A] * valid_actions
    pol = pol / jnp.sum(pol, axis=1, keepdims=True)
    o = 1 + A
    s1x = y[:, o:o + res0]; o += res0
    s1y = y[:, o:o + res1]; o += res1
    s2x = y[:, o:o + res0]; o += res0
    s2y = y[:, o:o + res1]
    return v, pol, s1x, s1y, s2x, s2y


if __name__ == "__main__":
    key = jax.random.PRNGKey(0)
    k_param, k_m, k_s, k_n = jax.random.split(key, 4)

    B = 2
    minimap_channels = 4
    screen_channels = 4
    screen_resolution = (32, 32)   # conv out 7x7 -> 2x2; conv features = 32*2*2 = 128
    nonspatial_obs_dim = 8
    num_action = 8

    params, forward = make_atari_net(k_param, minimap_channels, screen_channels,
                                     screen_resolution, nonspatial_obs_dim, num_action)

    obs_minimap = jax.random.normal(k_m, (B, minimap_channels) + screen_resolution, jnp.float32)
    obs_screen = jax.random.normal(k_s, (B, screen_channels) + screen_resolution, jnp.float32)
    obs_nonspatial = jax.random.normal(k_n, (B, nonspatial_obs_dim), jnp.float32)
    valid_actions = jnp.array([1, 1, 0, 1, 0, 1, 1, 1], jnp.float32)

    outs = forward(params, obs_minimap, obs_screen, obs_nonspatial, valid_actions)
    outs = jax.block_until_ready(outs)
    v, pol, s1x, s1y, s2x, s2y = outs

    assert v.shape == (B, 1)
    assert pol.shape == (B, num_action)
    assert s1x.shape == (B, screen_resolution[0])
    assert s1y.shape == (B, screen_resolution[1])
    assert s2x.shape == (B, screen_resolution[0])
    assert s2y.shape == (B, screen_resolution[1])

    # sanity vs pure-JAX reference (loose tolerance: Pallas path runs bf16 activations on the MXU).
    # The reference uses PyTorch-order (channel-major) flatten + unpermuted hidden weights, so
    # the init-time weight-row permutation is validated end to end.
    rv, rpol, r1x, r1y, r2x, r2y = _reference_forward(
        params, obs_minimap, obs_screen, obs_nonspatial, valid_actions,
        num_action, screen_resolution[0], screen_resolution[1])
    for got, want in ((v, rv), (s1x, r1x), (s1y, r1y), (s2x, r2x), (s2y, r2y)):
        assert bool(jnp.allclose(got, want, rtol=1e-1, atol=1e-1))
    assert bool(jnp.allclose(pol * (1.0 - valid_actions), 0.0))        # invalid actions -> 0
    assert bool(jnp.allclose(pol.sum(axis=1), 1.0, atol=1e-2))         # masked policy normalized

    print("KERNEL_OK")
</pallas_src>

<mosaic_0001>
module attributes {stable_mosaic.version = 11 : i64} {
  func.func @_conv_pair_kernel(%arg0: i32, %arg1: i32, %arg2: memref<1x112x256xbf16, #tpu.memory_space<vmem>>, %arg3: memref<1x256x16xbf16, #tpu.memory_space<vmem>>, %arg4: memref<1x1x16xf32, #tpu.memory_space<vmem>>, %arg5: memref<1x112x16xbf16, #tpu.memory_space<vmem>>) attributes {dimension_semantics = [#tpu.dimension_semantics<parallel>, #tpu.dimension_semantics<parallel>], iteration_bounds = array<i64: 2, 1>, scalar_prefetch = 0 : i64, scratch_operands = 0 : i64, tpu.core_type = #tpu.core_type<tc>, window_params = [{transform_indices = @transform_0, window_bounds = array<i64: 1, 112, 256>}, {transform_indices = @transform_1, window_bounds = array<i64: 1, 256, 16>}, {transform_indices = @transform_2, window_bounds = array<i64: 1, 1, 16>}, {transform_indices = @transform_3, window_bounds = array<i64: 1, 112, 16>}]} {
    %c0 = arith.constant 0 : index
    %c0_0 = arith.constant 0 : index
    %c0_1 = arith.constant 0 : index
    %0 = vector.load %arg2[%c0, %c0_0, %c0_1] : memref<1x112x256xbf16, #tpu.memory_space<vmem>>, vector<1x112x256xbf16>
    %1 = vector.shape_cast %0 : vector<1x112x256xbf16> to vector<112x256xbf16>
    %c0_2 = arith.constant 0 : index
    %c0_3 = arith.constant 0 : index
    %c0_4 = arith.constant 0 : index
    %2 = vector.load %arg3[%c0_2, %c0_3, %c0_4] : memref<1x256x16xbf16, #tpu.memory_space<vmem>>, vector<1x256x16xbf16>
    %3 = vector.shape_cast %2 : vector<1x256x16xbf16> to vector<256x16xbf16>
    %cst = arith.constant dense<0.000000e+00> : vector<112x16xf32>
    %4 = tpu.matmul %1, %3, %cst {dimension_numbers = #tpu.dot_dimension_numbers<[1], [0], [0], [1], [0, 0, 1, 1], [], []>} : vector<112x256xbf16>, vector<256x16xbf16>, vector<112x16xf32> -> vector<112x16xf32>
    %c0_5 = arith.constant 0 : index
    %c0_6 = arith.constant 0 : index
    %c0_7 = arith.constant 0 : index
    %5 = vector.load %arg4[%c0_5, %c0_6, %c0_7] : memref<1x1x16xf32, #tpu.memory_space<vmem>>, vector<1x1x16xf32>
    %6 = vector.shape_cast %5 : vector<1x1x16xf32> to vector<1x16xf32>
    %7 = vector.broadcast %6 : vector<1x16xf32> to vector<112x16xf32>
    %8 = arith.addf %4, %7 : vector<112x16xf32>
    %cst_8 = arith.constant 0.000000e+00 : f32
    %9 = vector.broadcast %cst_8 : f32 to vector<112x16xf32>
    %10 = arith.maximumf %8, %9 : vector<112x16xf32>
    %11 = arith.truncf %10 : vector<112x16xf32> to vector<112x16xbf16>
    %c0_9 = arith.constant 0 : index
    %c0_10 = arith.constant 0 : index
    %c0_11 = arith.constant 0 : index
    %12 = vector.load %arg5[%c0_9, %c0_10, %c0_11] : memref<1x112x16xbf16, #tpu.memory_space<vmem>>, vector<1x112x16xbf16>
    %13 = vector.shape_cast %12 : vector<1x112x16xbf16> to vector<112x16xbf16>
    %14 = vector.shape_cast %11 : vector<112x16xbf16> to vector<1x112x16xbf16>
    tpu.vector_store %arg5[%c0_9, %c0_10, %c0_11], %14 {strides = array<i32>} : memref<1x112x16xbf16, #tpu.memory_space<vmem>>, vector<1x112x16xbf16>,
    return
  }
  func.func @transform_0(%arg0: i32, %arg1: i32) -> (i32, i32, i32) {
    %c0_i32 = arith.constant 0 : i32
    %c0_i32_0 = arith.constant 0 : i32
    return %arg0, %arg1, %c0_i32 : i32, i32, i32
  }
  func.func @transform_1(%arg0: i32, %arg1: i32) -> (i32, i32, i32) {
    %c0_i32 = arith.constant 0 : i32
    %c0_i32_0 = arith.constant 0 : i32
    %c0_i32_1 = arith.constant 0 : i32
    return %arg0, %c0_i32, %c0_i32_0 : i32, i32, i32
  }
  func.func @transform_2(%arg0: i32, %arg1: i32) -> (i32, i32, i32) {
    %c0_i32 = arith.constant 0 : i32
    %c0_i32_0 = arith.constant 0 : i32
    %c0_i32_1 = arith.constant 0 : i32
    return %arg0, %c0_i32, %c0_i32_0 : i32, i32, i32
  }
  func.func @transform_3(%arg0: i32, %arg1: i32) -> (i32, i32, i32) {
    %c0_i32 = arith.constant 0 : i32
    %c0_i32_0 = arith.constant 0 : i32
    return %arg0, %arg1, %c0_i32 : i32, i32, i32
  }
}

module attributes {stable_mosaic.version = 11 : i64} {
  func.func @_conv_pair_kernel(%arg0: i32, %arg1: i32, %arg2: memref<1x16x256xbf16, #tpu.memory_space<vmem>>, %arg3: memref<1x256x32xbf16, #tpu.memory_space<vmem>>, %arg4: memref<1x1x32xf32, #tpu.memory_space<vmem>>, %arg5: memref<1x16x32xbf16, #tpu.memory_space<vmem>>) attributes {dimension_semantics = [#tpu.dimension_semantics<parallel>, #tpu.dimension_semantics<parallel>], iteration_bounds = array<i64: 2, 1>, scalar_prefetch = 0 : i64, scratch_operands = 0 : i64, tpu.core_type = #tpu.core_type<tc>, window_params = [{transform_indices = @transform_0, window_bounds = array<i64: 1, 16, 256>}, {transform_indices = @transform_1, window_bounds = array<i64: 1, 256, 32>}, {transform_indices = @transform_2, window_bounds = array<i64: 1, 1, 32>}, {transform_indices = @transform_3, window_bounds = array<i64: 1, 16, 32>}]} {
    %c0 = arith.constant 0 : index
    %c0_0 = arith.constant 0 : index
    %c0_1 = arith.constant 0 : index
    %0 = vector.load %arg2[%c0, %c0_0, %c0_1] : memref<1x16x256xbf16, #tpu.memory_space<vmem>>, vector<1x16x256xbf16>
    %1 = vector.shape_cast %0 : vector<1x16x256xbf16> to vector<16x256xbf16>
    %c0_2 = arith.constant 0 : index
    %c0_3 = arith.constant 0 : index
    %c0_4 = arith.constant 0 : index
    %2 = vector.load %arg3[%c0_2, %c0_3, %c0_4] : memref<1x256x32xbf16, #tpu.memory_space<vmem>>, vector<1x256x32xbf16>
    %3 = vector.shape_cast %2 : vector<1x256x32xbf16> to vector<256x32xbf16>
    %cst = arith.constant dense<0.000000e+00> : vector<16x32xf32>
    %4 = tpu.matmul %1, %3, %cst {dimension_numbers = #tpu.dot_dimension_numbers<[1], [0], [0], [1], [0, 0, 1, 1], [], []>} : vector<16x256xbf16>, vector<256x32xbf16>, vector<16x32xf32> -> vector<16x32xf32>
    %c0_5 = arith.constant 0 : index
    %c0_6 = arith.constant 0 : index
    %c0_7 = arith.constant 0 : index
    %5 = vector.load %arg4[%c0_5, %c0_6, %c0_7] : memref<1x1x32xf32, #tpu.memory_space<vmem>>, vector<1x1x32xf32>
    %6 = vector.shape_cast %5 : vector<1x1x32xf32> to vector<1x32xf32>
    %7 = vector.broadcast %6 : vector<1x32xf32> to vector<16x32xf32>
    %8 = arith.addf %4, %7 : vector<16x32xf32>
    %cst_8 = arith.constant 0.000000e+00 : f32
    %9 = vector.broadcast %cst_8 : f32 to vector<16x32xf32>
    %10 = arith.maximumf %8, %9 : vector<16x32xf32>
    %11 = arith.truncf %10 : vector<16x32xf32> to vector<16x32xbf16>
    %c0_9 = arith.constant 0 : index
    %c0_10 = arith.constant 0 : index
    %c0_11 = arith.constant 0 : index
    %12 = vector.load %arg5[%c0_9, %c0_10, %c0_11] : memref<1x16x32xbf16, #tpu.memory_space<vmem>>, vector<1x16x32xbf16>
    %13 = vector.shape_cast %12 : vector<1x16x32xbf16> to vector<16x32xbf16>
    %14 = vector.shape_cast %11 : vector<16x32xbf16> to vector<1x16x32xbf16>
    tpu.vector_store %arg5[%c0_9, %c0_10, %c0_11], %14 {strides = array<i32>} : memref<1x16x32xbf16, #tpu.memory_space<vmem>>, vector<1x16x32xbf16>,
    return
  }
  func.func @transform_0(%arg0: i32, %arg1: i32) -> (i32, i32, i32) {
    %c0_i32 = arith.constant 0 : i32
    %c0_i32_0 = arith.constant 0 : i32
    return %arg0, %arg1, %c0_i32 : i32, i32, i32
  }
  func.func @transform_1(%arg0: i32, %arg1: i32) -> (i32, i32, i32) {
    %c0_i32 = arith.constant 0 : i32
    %c0_i32_0 = arith.constant 0 : i32
    %c0_i32_1 = arith.constant 0 : i32
    return %arg0, %c0_i32, %c0_i32_0 : i32, i32, i32
  }
  func.func @transform_2(%arg0: i32, %arg1: i32) -> (i32, i32, i32) {
    %c0_i32 = arith.constant 0 : i32
    %c0_i32_0 = arith.constant 0 : i32
    %c0_i32_1 = arith.constant 0 : i32
    return %arg0, %c0_i32, %c0_i32_0 : i32, i32, i32
  }
  func.func @transform_3(%arg0: i32, %arg1: i32) -> (i32, i32, i32) {
    %c0_i32 = arith.constant 0 : i32
    %c0_i32_0 = arith.constant 0 : i32
    return %arg0, %arg1, %c0_i32 : i32, i32, i32
  }
}

module attributes {stable_mosaic.version = 11 : i64} {
  func.func @_mlp_heads_kernel(%arg0: i32, %arg1: memref<16x128xbf16, #tpu.memory_space<vmem>>, %arg2: memref<16x128xbf16, #tpu.memory_space<vmem>>, %arg3: memref<16x128xbf16, #tpu.memory_space<vmem>>, %arg4: memref<128x256xbf16, #tpu.memory_space<vmem>>, %arg5: memref<1x256xf32, #tpu.memory_space<vmem>>, %arg6: memref<128x256xbf16, #tpu.memory_space<vmem>>, %arg7: memref<128x256xbf16, #tpu.memory_space<vmem>>, %arg8: memref<256x256xbf16, #tpu.memory_space<vmem>>, %arg9: memref<1x256xf32, #tpu.memory_space<vmem>>, %arg10: memref<256x256xbf16, #tpu.memory_space<vmem>>, %arg11: memref<1x256xf32, #tpu.memory_space<vmem>>, %arg12: memref<1x256xf32, #tpu.memory_space<vmem>>, %arg13: memref<1x256xf32, #tpu.memory_space<vmem>>, %arg14: memref<16x256xf32, #tpu.memory_space<vmem>>) attributes {dimension_semantics = [#tpu.dimension_semantics<parallel>], iteration_bounds = array<i64: 1>, scalar_prefetch = 0 : i64, scratch_operands = 0 : i64, tpu.core_type = #tpu.core_type<tc>, window_params = [{transform_indices = @transform_0, window_bounds = array<i64: 16, 128>}, {transform_indices = @transform_1, window_bounds = array<i64: 16, 128>}, {transform_indices = @transform_2, window_bounds = array<i64: 16, 128>}, {pipeline_mode = #tpu.pipeline_mode<synchronous>, transform_indices = @transform_3, window_bounds = array<i64: 128, 256>}, {pipeline_mode = #tpu.pipeline_mode<synchronous>, transform_indices = @transform_4, window_bounds = array<i64: 1, 256>}, {pipeline_mode = #tpu.pipeline_mode<synchronous>, transform_indices = @transform_5, window_bounds = array<i64: 128, 256>}, {pipeline_mode = #tpu.pipeline_mode<synchronous>, transform_indices = @transform_6, window_bounds = array<i64: 128, 256>}, {pipeline_mode = #tpu.pipeline_mode<synchronous>, transform_indices = @transform_7, window_bounds = array<i64: 256, 256>}, {pipeline_mode = #tpu.pipeline_mode<synchronous>, transform_indices = @transform_8, window_bounds = array<i64: 1, 256>}, {pipeline_mode = #tpu.pipeline_mode<synchronous>, transform_indices = @transform_9, window_bounds = array<i64: 256, 256>}, {pipeline_mode = #tpu.pipeline_mode<synchronous>, transform_indices = @transform_10, window_bounds = array<i64: 1, 256>}, {pipeline_mode = #tpu.pipeline_mode<synchronous>, transform_indices = @transform_11, window_bounds = array<i64: 1, 256>}, {pipeline_mode = #tpu.pipeline_mode<synchronous>, transform_indices = @transform_12, window_bounds = array<i64: 1, 256>}, {transform_indices = @transform_13, window_bounds = array<i64: 16, 256>}]} {
    %c0 = arith.constant 0 : index
    %c0_0 = arith.constant 0 : index
    %0 = vector.load %arg3[%c0, %c0_0] : memref<16x128xbf16, #tpu.memory_space<vmem>>, vector<16x128xbf16>
    %c0_1 = arith.constant 0 : index
    %c0_2 = arith.constant 0 : index
    %1 = vector.load %arg4[%c0_1, %c0_2] : memref<128x256xbf16, #tpu.memory_space<vmem>>, vector<128x256xbf16>
    %cst = arith.constant dense<0.000000e+00> : vector<16x256xf32>
    %2 = tpu.matmul %0, %1, %cst {dimension_numbers = #tpu.dot_dimension_numbers<[1], [0], [0], [1], [0, 0, 1, 1], [], []>} : vector<16x128xbf16>, vector<128x256xbf16>, vector<16x256xf32> -> vector<16x256xf32>
    %c0_3 = arith.constant 0 : index
    %c0_4 = arith.constant 0 : index
    %3 = vector.load %arg5[%c0_3, %c0_4] : memref<1x256xf32, #tpu.memory_space<vmem>>, vector<1x256xf32>
    %4 = vector.broadcast %3 : vector<1x256xf32> to vector<16x256xf32>
    %5 = arith.addf %2, %4 : vector<16x256xf32>
    %6 = math.tanh %5 : vector<16x256xf32>
    %c0_5 = arith.constant 0 : index
    %c0_6 = arith.constant 0 : index
    %7 = vector.load %arg1[%c0_5, %c0_6] : memref<16x128xbf16, #tpu.memory_space<vmem>>, vector<16x128xbf16>
    %c0_7 = arith.constant 0 : index
    %c0_8 = arith.constant 0 : index
    %8 = vector.load %arg6[%c0_7, %c0_8] : memref<128x256xbf16, #tpu.memory_space<vmem>>, vector<128x256xbf16>
    %cst_9 = arith.constant dense<0.000000e+00> : vector<16x256xf32>
    %9 = tpu.matmul %7, %8, %cst_9 {dimension_numbers = #tpu.dot_dimension_numbers<[1], [0], [0], [1], [0, 0, 1, 1], [], []>} : vector<16x128xbf16>, vector<128x256xbf16>, vector<16x256xf32> -> vector<16x256xf32>
    %c0_10 = arith.constant 0 : index
    %c0_11 = arith.constant 0 : index
    %10 = vector.load %arg2[%c0_10, %c0_11] : memref<16x128xbf16, #tpu.memory_space<vmem>>, vector<16x128xbf16>
    %c0_12 = arith.constant 0 : index
    %c0_13 = arith.constant 0 : index
    %11 = vector.load %arg7[%c0_12, %c0_13] : memref<128x256xbf16, #tpu.memory_space<vmem>>, vector<128x256xbf16>
    %cst_14 = arith.constant dense<0.000000e+00> : vector<16x256xf32>
    %12 = tpu.matmul %10, %11, %cst_14 {dimension_numbers = #tpu.dot_dimension_numbers<[1], [0], [0], [1], [0, 0, 1, 1], [], []>} : vector<16x128xbf16>, vector<128x256xbf16>, vector<16x256xf32> -> vector<16x256xf32>
    %13 = arith.addf %9, %12 : vector<16x256xf32>
    %14 = arith.truncf %6 : vector<16x256xf32> to vector<16x256xbf16>
    %c0_15 = arith.constant 0 : index
    %c0_16 = arith.constant 0 : index
    %15 = vector.load %arg8[%c0_15, %c0_16] : memref<256x256xbf16, #tpu.memory_space<vmem>>, vector<256x256xbf16>
    %cst_17 = arith.constant dense<0.000000e+00> : vector<16x256xf32>
    %16 = tpu.matmul %14, %15, %cst_17 {dimension_numbers = #tpu.dot_dimension_numbers<[1], [0], [0], [1], [0, 0, 1, 1], [], []>} : vector<16x256xbf16>, vector<256x256xbf16>, vector<16x256xf32> -> vector<16x256xf32>
    %17 = arith.addf %13, %16 : vector<16x256xf32>
    %c0_18 = arith.constant 0 : index
    %c0_19 = arith.constant 0 : index
    %18 = vector.load %arg9[%c0_18, %c0_19] : memref<1x256xf32, #tpu.memory_space<vmem>>, vector<1x256xf32>
    %19 = vector.broadcast %18 : vector<1x256xf32> to vector<16x256xf32>
    %20 = arith.addf %17, %19 : vector<16x256xf32>
    %cst_20 = arith.constant 0.000000e+00 : f32
    %21 = vector.broadcast %cst_20 : f32 to vector<16x256xf32>
    %22 = arith.maximumf %20, %21 : vector<16x256xf32>
    %23 = arith.truncf %22 : vector<16x256xf32> to vector<16x256xbf16>
    %c0_21 = arith.constant 0 : index
    %c0_22 = arith.constant 0 : index
    %24 = vector.load %arg10[%c0_21, %c0_22] : memref<256x256xbf16, #tpu.memory_space<vmem>>, vector<256x256xbf16>
    %cst_23 = arith.constant dense<0.000000e+00> : vector<16x256xf32>
    %25 = tpu.matmul %23, %24, %cst_23 {dimension_numbers = #tpu.dot_dimension_numbers<[1], [0], [0], [1], [0, 0, 1, 1], [], []>} : vector<16x256xbf16>, vector<256x256xbf16>, vector<16x256xf32> -> vector<16x256xf32>
    %c0_24 = arith.constant 0 : index
    %c0_25 = arith.constant 0 : index
    %26 = vector.load %arg11[%c0_24, %c0_25] : memref<1x256xf32, #tpu.memory_space<vmem>>, vector<1x256xf32>
    %27 = vector.broadcast %26 : vector<1x256xf32> to vector<16x256xf32>
    %28 = arith.addf %25, %27 : vector<16x256xf32>
    %c0_26 = arith.constant 0 : index
    %c0_27 = arith.constant 0 : index
    %29 = vector.load %arg12[%c0_26, %c0_27] : memref<1x256xf32, #tpu.memory_space<vmem>>, vector<1x256xf32>
    %30 = vector.broadcast %29 : vector<1x256xf32> to vector<16x256xf32>
    %31 = arith.mulf %28, %30 : vector<16x256xf32>
    %cst_28 = arith.constant dense<0.000000e+00> : vector<16xf32>
    %32 = vector.multi_reduction <add>, %31, %cst_28 [1] : vector<16x256xf32> to vector<16xf32>
    %33 = vector.shape_cast %32 : vector<16xf32> to vector<16x1xf32>
    %34 = tpu.reciprocal %33 {approx = true} : vector<16x1xf32> -> vector<16x1xf32>
    %c0_29 = arith.constant 0 : index
    %c0_30 = arith.constant 0 : index
    %35 = vector.load %arg13[%c0_29, %c0_30] : memref<1x256xf32, #tpu.memory_space<vmem>>, vector<1x256xf32>
    %cst_31 = arith.constant 0.000000e+00 : f32
    %36 = vector.broadcast %cst_31 : f32 to vector<1x256xf32>
    %37 = arith.cmpf ogt, %35, %36 : vector<1x256xf32>
    %38 = vector.broadcast %34 : vector<16x1xf32> to vector<16x256xf32>
    %39 = arith.mulf %31, %38 : vector<16x256xf32>
    %40 = vector.shape_cast %37 : vector<1x256xi1> to vector<1x256xi1>
    %41 = vector.broadcast %40 : vector<1x256xi1> to vector<16x256xi1>
    %42 = arith.select %41, %39, %28 : vector<16x256xi1>, vector<16x256xf32>
    %c0_32 = arith.constant 0 : index
    %c0_33 = arith.constant 0 : index
    %43 = vector.load %arg14[%c0_32, %c0_33] : memref<16x256xf32, #tpu.memory_space<vmem>>, vector<16x256xf32>
    tpu.vector_store %arg14[%c0_32, %c0_33], %42 {strides = array<i32>} : memref<16x256xf32, #tpu.memory_space<vmem>>, vector<16x256xf32>,
    return
  }
  func.func @transform_0(%arg0: i32) -> (i32, i32) {
    %c0_i32 = arith.constant 0 : i32
    %c0_i32_0 = arith.constant 0 : i32
    return %arg0, %c0_i32 : i32, i32
  }
  func.func @transform_1(%arg0: i32) -> (i32, i32) {
    %c0_i32 = arith.constant 0 : i32
    %c0_i32_0 = arith.constant 0 : i32
    return %arg0, %c0_i32 : i32, i32
  }
  func.func @transform_2(%arg0: i32) -> (i32, i32) {
    %c0_i32 = arith.constant 0 : i32
    %c0_i32_0 = arith.constant 0 : i32
    return %arg0, %c0_i32 : i32, i32
  }
  func.func @transform_3(%arg0: i32) -> (i32, i32) {
    %c0_i32 = arith.constant 0 : i32
    %c0_i32_0 = arith.constant 0 : i32
    %c0_i32_1 = arith.constant 0 : i32
    return %c0_i32, %c0_i32_0 : i32, i32
  }
  func.func @transform_4(%arg0: i32) -> (i32, i32) {
    %c0_i32 = arith.constant 0 : i32
    %c0_i32_0 = arith.constant 0 : i32
    %c0_i32_1 = arith.constant 0 : i32
    return %c0_i32, %c0_i32_0 : i32, i32
  }
  func.func @transform_5(%arg0: i32) -> (i32, i32) {
    %c0_i32 = arith.constant 0 : i32
    %c0_i32_0 = arith.constant 0 : i32
    %c0_i32_1 = arith.constant 0 : i32
    return %c0_i32, %c0_i32_0 : i32, i32
  }
  func.func @transform_6(%arg0: i32) -> (i32, i32) {
    %c0_i32 = arith.constant 0 : i32
    %c0_i32_0 = arith.constant 0 : i32
    %c0_i32_1 = arith.constant 0 : i32
    return %c0_i32, %c0_i32_0 : i32, i32
  }
  func.func @transform_7(%arg0: i32) -> (i32, i32) {
    %c0_i32 = arith.constant 0 : i32
    %c0_i32_0 = arith.constant 0 : i32
    %c0_i32_1 = arith.constant 0 : i32
    return %c0_i32, %c0_i32_0 : i32, i32
  }
  func.func @transform_8(%arg0: i32) -> (i32, i32) {
    %c0_i32 = arith.constant 0 : i32
    %c0_i32_0 = arith.constant 0 : i32
    %c0_i32_1 = arith.constant 0 : i32
    return %c0_i32, %c0_i32_0 : i32, i32
  }
  func.func @transform_9(%arg0: i32) -> (i32, i32) {
    %c0_i32 = arith.constant 0 : i32
    %c0_i32_0 = arith.constant 0 : i32
    %c0_i32_1 = arith.constant 0 : i32
    return %c0_i32, %c0_i32_0 : i32, i32
  }
  func.func @transform_10(%arg0: i32) -> (i32, i32) {
    %c0_i32 = arith.constant 0 : i32
    %c0_i32_0 = arith.constant 0 : i32
    %c0_i32_1 = arith.constant 0 : i32
    return %c0_i32, %c0_i32_0 : i32, i32
  }
  func.func @transform_11(%arg0: i32) -> (i32, i32) {
    %c0_i32 = arith.constant 0 : i32
    %c0_i32_0 = arith.constant 0 : i32
    %c0_i32_1 = arith.constant 0 : i32
    return %c0_i32, %c0_i32_0 : i32, i32
  }
  func.func @transform_12(%arg0: i32) -> (i32, i32) {
    %c0_i32 = arith.constant 0 : i32
    %c0_i32_0 = arith.constant 0 : i32
    %c0_i32_1 = arith.constant 0 : i32
    return %c0_i32, %c0_i32_0 : i32, i32
  }
  func.func @transform_13(%arg0: i32) -> (i32, i32) {
    %c0_i32 = arith.constant 0 : i32
    %c0_i32_0 = arith.constant 0 : i32
    return %arg0, %c0_i32 : i32, i32
  }
}

</mosaic_0001>

<llo_original>
// kernel: forward.3
$region0: #{forward.3}
  #allocation0 [shape = 'u32[]', space=smem, size = 0x4, offset = 0x4, fixed_abs, tag = 'smem constant byte address 0x4 - core index']
  #allocation1 [shape = 'u32[72,128]{1,0:T(1,128)}', space=vmem, size = 0x9000, scoped, tag = 'internal scratch']
  %s0 = inlined_call_operand.vmem [shape: bf16[2,98,256], index: 0, kind: input, shape index: {}]
  %s1 = inlined_call_operand.vmem [shape: bf16[2,256,16], index: 1, kind: input, shape index: {}]
  %s2 = inlined_call_operand.vmem [shape: f32[2,1,16], index: 2, kind: input, shape index: {}]
  %s3 = inlined_call_operand.vmem [shape: bf16[2,98,16], index: 3, kind: output, shape index: {}]
  %s4 = sld [smem:[#allocation0]]
  $region89: #{forward.3} parent=0
    _
  %s6 = ssub.s32 1, %s4
  %s7 = scalar_select 0, %s6, %s4
  $region1: #{forward.3} parent=0
    #allocation2 [shape = 'u8[57344]{0}', space=vmem, size = 0xe000, scoped, tag = 'output window, operand 0']
    loop: start=0, step=1, limit=4
    $region2: #{forward.3} parent=1 // loop_pre_header
      _
    $region3: #{forward.3} parent=1 // loop_header
      %s9 = sphi 0, %s13
      %p10 = scmp.ge.s32.totalorder %s9, 4
      %s16 = sphi 0, %s28
      %s17 = sphi 0, %s24
      %s18 = sphi 0, %s16
      %s19 = sphi 0, %s17
      %s20 = sphi 0, %s18
      %s21 = sphi 0, %s19
      %s33 = sphi 0, %s35
      %s36 = sphi 0, %s33
      %s37 = sphi 0, %s36
      %s53 = sphi 0, %s37
      %s59 = sphi 0, %s61
      %s62 = sphi 0, %s59
      %s63 = sphi 0, %s62
      %s79 = sphi 0, %s63
      %s85 = sphi 0, %s87
      %s88 = sphi 0, %s85
      %s89 = sphi 0, %s88
      %s105 = sphi 0, %s89
      %s113 = sphi 0, %s115
      %s116 = sphi 0, %s113
      %s117 = sphi 0, %s116
      %s133 = sphi 0, %s117
    $region4: #{forward.3} parent=1 // loop_header_branch
      %12 = sbr.rel (%p10) target = $region8
    $region5: #{forward.3} parent=1 // loop_body
      %s14 = ssub.s32 %s9, 1
      %s15 = ssub.s32 %s9, 2
      %s22 = sadd.s32 1, %s17
      %p23 = scmp.ge.s32.totalorder %s22, 1
      %s24 = scalar_select %p23, 0, %s22
      %s25 = sadd.s32 1, %s16
      %s26 = scalar_select %p23, %s25, %s16
      %p27 = scmp.ge.s32.totalorder %s26, 2
      %s28 = scalar_select %p27, 0, %s26
      %s29 = ssub.s32 %s16, %s28
      %s30 = ssub.s32 %s17, %s24
      %s31 = sor.u32 %s29, %s30
      %p32 = scmp.eq.s32.totalorder %s31, 0
      %s34 = sadd.s32 %s33, 1
      %s35 = scalar_select %p32, %s33, %s34
      %p38 = pneg %p32
      %p39 = scmp.eq.s32.totalorder %s9, 1
      %p40 = por %p38, %p39
      %p41 = scmp.ne.s32.totalorder %s33, %s36
      %p42 = scmp.eq.s32.totalorder %s9, 0
      %p43 = por %p41, %p42
      %p44 = scmp.ne.s32.totalorder %s33, %s36
      %p45 = scmp.eq.s32.totalorder %s14, 1
      %p46 = por %p44, %p45
      %p47 = scmp.ne.s32.totalorder %s36, %s37
      %p48 = scmp.eq.s32.totalorder %s14, 0
      %p49 = por %p47, %p48
      %p50 = scmp.ne.s32.totalorder %s36, %s37
      %p51 = scmp.eq.s32.totalorder %s15, 1
      %p52 = por %p50, %p51
      %p54 = scmp.ne.s32.totalorder %s37, %s53
      %p55 = scmp.eq.s32.totalorder %s15, 0
      %p56 = por %p54, %p55
      %s57 = ssub.s32 %s16, %s28
      %p58 = scmp.eq.s32.totalorder %s57, 0
      %s60 = sadd.s32 %s59, 1
      %s61 = scalar_select %p58, %s59, %s60
      %p64 = pneg %p58
      %p65 = scmp.eq.s32.totalorder %s9, 1
      %p66 = por %p64, %p65
      %p67 = scmp.ne.s32.totalorder %s59, %s62
      %p68 = scmp.eq.s32.totalorder %s9, 0
      %p69 = por %p67, %p68
      %p70 = scmp.ne.s32.totalorder %s59, %s62
      %p71 = scmp.eq.s32.totalorder %s14, 1
      %p72 = por %p70, %p71
      %p73 = scmp.ne.s32.totalorder %s62, %s63
      %p74 = scmp.eq.s32.totalorder %s14, 0
      %p75 = por %p73, %p74
      %p76 = scmp.ne.s32.totalorder %s62, %s63
      %p77 = scmp.eq.s32.totalorder %s15, 1
      %p78 = por %p76, %p77
      %p80 = scmp.ne.s32.totalorder %s63, %s79
      %p81 = scmp.eq.s32.totalorder %s15, 0
      %p82 = por %p80, %p81
      %s83 = ssub.s32 %s16, %s28
      %p84 = scmp.eq.s32.totalorder %s83, 0
      %s86 = sadd.s32 %s85, 1
      %s87 = scalar_select %p84, %s85, %s86
      %p90 = pneg %p84
      %p91 = scmp.eq.s32.totalorder %s9, 1
      %p92 = por %p90, %p91
      %p93 = scmp.ne.s32.totalorder %s85, %s88
      %p94 = scmp.eq.s32.totalorder %s9, 0
      %p95 = por %p93, %p94
      %p96 = scmp.ne.s32.totalorder %s85, %s88
      %p97 = scmp.eq.s32.totalorder %s14, 1
      %p98 = por %p96, %p97
      %p99 = scmp.ne.s32.totalorder %s88, %s89
      %p100 = scmp.eq.s32.totalorder %s14, 0
      %p101 = por %p99, %p100
      %p102 = scmp.ne.s32.totalorder %s88, %s89
      %p103 = scmp.eq.s32.totalorder %s15, 1
      %p104 = por %p102, %p103
      %p106 = scmp.ne.s32.totalorder %s89, %s105
      %p107 = scmp.eq.s32.totalorder %s15, 0
      %p108 = por %p106, %p107
      %s109 = ssub.s32 %s16, %s28
      %s110 = ssub.s32 %s17, %s24
      %s111 = sor.u32 %s109, %s110
      %p112 = scmp.eq.s32.totalorder %s111, 0
      %s114 = sadd.s32 %s113, 1
      %s115 = scalar_select %p112, %s113, %s114
      %p118 = pneg %p112
      %p119 = scmp.eq.s32.totalorder %s9, 1
      %p120 = por %p118, %p119
      %p121 = scmp.ne.s32.totalorder %s113, %s116
      %p122 = scmp.eq.s32.totalorder %s9, 0
      %p123 = por %p121, %p122
      %p124 = scmp.ne.s32.totalorder %s113, %s116
      %p125 = scmp.eq.s32.totalorder %s14, 1
      %p126 = por %p124, %p125
      %p127 = scmp.ne.s32.totalorder %s116, %s117
      %p128 = scmp.eq.s32.totalorder %s14, 0
      %p129 = por %p127, %p128
      %p130 = scmp.ne.s32.totalorder %s116, %s117
      %p131 = scmp.eq.s32.totalorder %s15, 1
      %p132 = por %p130, %p131
      %p134 = scmp.ne.s32.totalorder %s117, %s133
      %p135 = scmp.eq.s32.totalorder %s15, 0
      %p136 = por %p134, %p135
      %p137 = scmp.le.s32.totalorder 1, %s9
      %p138 = scmp.lt.s32.totalorder %s9, 3
      %p139 = pnand %p137, %p138
      %p140 = pneg %p139
      // Predicated region
      $region9: #{forward.3} parent=5 // pred_check
        _
      $region10: #{forward.3} parent=5 // pred_check_branch
        %142 = sbr.rel (%p139) target = $region12
      $region11: #{forward.3} parent=5 // pred_region
        %s143 = ssub.s32 %s9, 1
      $region12: #{forward.3} parent=5 // pred_fallthru
        _
      %p144 = scmp.lt.s32.totalorder %s9, 2
      // Predicated region
      $region13: #{forward.3} parent=5 // pred_check
        %p145 = pneg %p144
      $region14: #{forward.3} parent=5 // pred_check_branch
        %147 = sbr.rel (%p145) target = $region16
      $region15: #{forward.3} parent=5 // pred_region
        // Predicated region
        $region17: #{forward.3} parent=15 // pred_check
          %p148 = pneg %p43
        $region18: #{forward.3} parent=15 // pred_check_branch
          %150 = sbr.rel (%p148) target = $region20
        $region19: #{forward.3} parent=15 // pred_region
          %s151 = smul.u32 14, %s17
          %s152 = ssub.s32 13, %s151
          %s153 = smul.u32 4, %s152
          %s154 = smul.u32 %s153, 2
          %p155 = scmp.lt.s32.totalorder %s16, 1
          %s156 = scalar_select %p155, %s16, 1
          %p157 = scmp.lt.s32.totalorder %s151, 12
          %s158 = scalar_select %p157, %s151, 12
          %s159 = smul.addr %s158, 2
          %s160 = smul.addr %s156, 26
          %s161 = sadd.s32 %s159, %s160
          %s162 = smul.addr %s161, 4
          %s163 = scalar_lea.vmem %s0, %s162
          %s164 = smul.u32 14, %s17
          %s165 = ssub.s32 13, %s164
          %s166 = smul.u32 4, %s165
          %s167 = smul.u32 %s166, 2
        $region20: #{forward.3} parent=15 // pred_fallthru
          _
        // Predicated region
        $region21: #{forward.3} parent=15 // pred_check
          %p168 = pneg %p69
        $region22: #{forward.3} parent=15 // pred_check_branch
          %170 = sbr.rel (%p168) target = $region24
        $region23: #{forward.3} parent=15 // pred_region
          %p171 = scmp.lt.s32.totalorder %s16, 1
          %s172 = scalar_select %p171, %s16, 1
          %s173 = smul.addr %s172, 32
          %s174 = smul.addr %s173, 4
          %s175 = scalar_lea.vmem %s1, %s174
        $region24: #{forward.3} parent=15 // pred_fallthru
          _
        // Predicated region
        $region25: #{forward.3} parent=15 // pred_check
          %p176 = pneg %p95
        $region26: #{forward.3} parent=15 // pred_check_branch
          %178 = sbr.rel (%p176) target = $region28
        $region27: #{forward.3} parent=15 // pred_region
          %p179 = scmp.lt.s32.totalorder %s16, 1
          %s180 = scalar_select %p179, %s16, 1
          %s181 = scalar_lea.vmem %s2, %s180
        $region28: #{forward.3} parent=15 // pred_fallthru
          _
      $region16: #{forward.3} parent=5 // pred_fallthru
        _
      %p182 = scmp.le.s32.totalorder 1, %s9
      %p183 = scmp.lt.s32.totalorder %s9, 3
      %p184 = pnand %p182, %p183
      %p185 = pneg %p184
      // Predicated region
      $region29: #{forward.3} parent=5 // pred_check
        _
      $region30: #{forward.3} parent=5 // pred_check_branch
        %187 = sbr.rel (%p184) target = $region32
      $region31: #{forward.3} parent=5 // pred_region
        %s188 = ssub.s32 %s9, 1
        %s189 = smul.u32 14, %s19
        %s190 = ssub.s32 13, %s189
        %s191 = smul.u32 4, %s190
        %s192 = smul.u32 %s191, 2
        %p193 = scmp.lt.s32.totalorder %s18, 1
        %s194 = scalar_select %p193, %s18, 1
        %p195 = scmp.lt.s32.totalorder %s189, 12
        %s196 = scalar_select %p195, %s189, 12
        %s197 = smul.addr %s196, 2
        %s198 = smul.addr %s194, 26
        %s199 = sadd.s32 %s197, %s198
        %s200 = smul.addr %s199, 4
        %s201 = scalar_lea.vmem %s0, %s200
        %p202 = pneg %p49
        %p203 = pneg %p46
        %p204 = scmp.lt.s32.totalorder %s18, 1
        %s205 = scalar_select %p204, %s18, 1
        %s206 = smul.addr %s205, 32
        %s207 = smul.addr %s206, 4
        %s208 = scalar_lea.vmem %s1, %s207
        %p209 = pneg %p75
        %p210 = pneg %p72
        %p211 = scmp.lt.s32.totalorder %s18, 1
        %s212 = scalar_select %p211, %s18, 1
        %s213 = scalar_lea.vmem %s2, %s212
        %p214 = pneg %p101
        %p215 = pneg %p98
        %p216 = pneg %p129
        %p217 = pneg %p126
        %s218 = sand.u32 %s116, 1
        %s219 = sand.u32 %s116, 1
        %s220 = smul.addr %s219, 56
        %s221 = scalar_lea.vmem [#allocation2], %s220
        %s222 = smul.u32 14, %s19
        %s223 = ssub.s32 13, %s222
        %s224 = smul.u32 4, %s223
        %s225 = smul.u32 %s224, 2
        %p226 = scmp.lt.s32.totalorder %s18, 1
        %s227 = scalar_select %p226, %s18, 1
        %p228 = scmp.lt.s32.totalorder %s222, 12
        %s229 = scalar_select %p228, %s222, 12
        %s230 = smul.addr %s229, 2
        %s231 = smul.addr %s227, 26
        %s232 = sadd.s32 %s230, %s231
        %s233 = smul.addr %s232, 4
        %s234 = scalar_lea.vmem %s0, %s233
        %s235 = smul.u32 14, %s19
        %s236 = ssub.s32 13, %s235
        %s237 = smul.u32 4, %s236
        %s238 = smul.u32 %s237, 2
        %p239 = scmp.lt.s32.totalorder %s18, 1
        %s240 = scalar_select %p239, %s18, 1
        %s241 = smul.addr %s240, 32
        %s242 = smul.addr %s241, 4
        %s243 = scalar_lea.vmem %s1, %s242
        %p244 = scmp.lt.s32.totalorder %s18, 1
        %s245 = scalar_select %p244, %s18, 1
        %s246 = scalar_lea.vmem %s2, %s245
        %s247 = smul.u32 14, %s19
        %s248 = ssub.s32 13, %s247
        %s249 = smul.u32 4, %s248
        %v250 = vld [vmem:[%s234] sm:$0xff]
        %v251 = vld [vmem:[%s234 + $0x8] sm:$0xff]
        %v252 = vld [vmem:[%s234 + $0x10] sm:$0xff]
        %v253 = vld [vmem:[%s234 + $0x18] sm:$0xff]
        %v254 = vld [vmem:[%s234 + $0x20] sm:$0xff]
        %v255 = vld [vmem:[%s234 + $0x28] sm:$0xff]
        %v256 = vld [vmem:[%s234 + $0x30] sm:$0xff]
        %v257 = vld [vmem:[%s234 + $0x38] sm:$0xff]
        %v258 = vld [vmem:[%s234 + $0x40] sm:$0xff]
        %v259 = vld [vmem:[%s234 + $0x48] sm:$0xff]
        %v260 = vld [vmem:[%s234 + $0x50] sm:$0xff]
        %v261 = vld [vmem:[%s234 + $0x58] sm:$0xff]
        %v262 = vld [vmem:[%s234 + $0x60] sm:$0xff]
        %v263 = vld [vmem:[%s234 + $0x68] sm:$0xff]
        %v264 = vld [vmem:[%s243] sm:$0xf]
        %v265 = vld [vmem:[%s243 + $0x4] sm:$0xf]
        %v266 = vld [vmem:[%s243 + $0x8] sm:$0xf]
        %v267 = vld [vmem:[%s243 + $0xc] sm:$0xf]
        %v268 = vld [vmem:[%s243 + $0x10] sm:$0xf]
        %v269 = vld [vmem:[%s243 + $0x14] sm:$0xf]
        %v270 = vld [vmem:[%s243 + $0x18] sm:$0xf]
        %v271 = vld [vmem:[%s243 + $0x1c] sm:$0xf]
        %v272 = vld [vmem:[%s243 + $0x20] sm:$0xf]
        %v273 = vld [vmem:[%s243 + $0x24] sm:$0xf]
        %v274 = vld [vmem:[%s243 + $0x28] sm:$0xf]
        %v275 = vld [vmem:[%s243 + $0x2c] sm:$0xf]
        %v276 = vld [vmem:[%s243 + $0x30] sm:$0xf]
        %v277 = vld [vmem:[%s243 + $0x34] sm:$0xf]
        %v278 = vld [vmem:[%s243 + $0x38] sm:$0xf]
        %v279 = vld [vmem:[%s243 + $0x3c] sm:$0xf]
        %v280 = vld [vmem:[%s243 + $0x40] sm:$0xf]
        %v281 = vld [vmem:[%s243 + $0x44] sm:$0xf]
        %v282 = vld [vmem:[%s243 + $0x48] sm:$0xf]
        %v283 = vld [vmem:[%s243 + $0x4c] sm:$0xf]
        %v284 = vld [vmem:[%s243 + $0x50] sm:$0xf]
        %v285 = vld [vmem:[%s243 + $0x54] sm:$0xf]
        %v286 = vld [vmem:[%s243 + $0x58] sm:$0xf]
        %v287 = vld [vmem:[%s243 + $0x5c] sm:$0xf]
        %v288 = vld [vmem:[%s243 + $0x60] sm:$0xf]
        %v289 = vld [vmem:[%s243 + $0x64] sm:$0xf]
        %v290 = vld [vmem:[%s243 + $0x68] sm:$0xf]
        %v291 = vld [vmem:[%s243 + $0x6c] sm:$0xf]
        %v292 = vld [vmem:[%s243 + $0x70] sm:$0xf]
        %v293 = vld [vmem:[%s243 + $0x74] sm:$0xf]
        %v294 = vld [vmem:[%s243 + $0x78] sm:$0xf]
        %v295 = vld [vmem:[%s243 + $0x7c] sm:$0xf]
        %v296 = vld [vmem:[%s246] sm:$0x1]
        %v298 = vperm.slane %v296, 0
        %v314 = vunpack.c.l.b16 %v250
        %v315 = vunpack.c.h.b16 %v250
        %v316 = vunpack.c.l.b16 %v251
        %v317 = vunpack.c.h.b16 %v251
        %v318 = vunpack.c.l.b16 %v252
        %v319 = vunpack.c.h.b16 %v252
        %v320 = vunpack.c.l.b16 %v253
        %v321 = vunpack.c.h.b16 %v253
        %v322 = vunpack.c.l.b16 %v254
        %v323 = vunpack.c.h.b16 %v254
        %v324 = vunpack.c.l.b16 %v255
        %v325 = vunpack.c.h.b16 %v255
        %v326 = vunpack.c.l.b16 %v256
        %v327 = vunpack.c.h.b16 %v256
        %v328 = vunpack.c.l.b16 %v257
        %v329 = vunpack.c.h.b16 %v257
        %v330 = vunpack.c.l.b16 %v258
        %v331 = vunpack.c.h.b16 %v258
        %v332 = vunpack.c.l.b16 %v259
        %v333 = vunpack.c.h.b16 %v259
        %v334 = vunpack.c.l.b16 %v260
        %v335 = vunpack.c.h.b16 %v260
        %v336 = vunpack.c.l.b16 %v261
        %v337 = vunpack.c.h.b16 %v261
        %v338 = vunpack.c.l.b16 %v262
        %v339 = vunpack.c.h.b16 %v262
        %v340 = vunpack.c.l.b16 %v263
        %v341 = vunpack.c.h.b16 %v263
        %v342 = vpack.c.b16 %v316, %v314
        %v343 = vpack.c.b16 %v317, %v315
        %v344 = vpack.c.b16 %v320, %v318
        %v345 = vpack.c.b16 %v321, %v319
        %v346 = vpack.c.b16 %v324, %v322
        %v347 = vpack.c.b16 %v325, %v323
        %v348 = vpack.c.b16 %v328, %v326
        %v349 = vpack.c.b16 %v329, %v327
        %v350 = vpack.c.b16 %v332, %v330
        %v351 = vpack.c.b16 %v333, %v331
        %v352 = vpack.c.b16 %v336, %v334
        %v353 = vpack.c.b16 %v337, %v335
        %v354 = vpack.c.b16 %v340, %v338
        %v355 = vpack.c.b16 %v341, %v339
        %v402 = vunpack.c.l.b16 %v264
        %v403 = vunpack.c.l.b16 %v265
        %v404 = vunpack.c.l.b16 %v266
        %v405 = vunpack.c.l.b16 %v267
        %v406 = vunpack.c.l.b16 %v268
        %v407 = vunpack.c.l.b16 %v269
        %v408 = vunpack.c.l.b16 %v270
        %v409 = vunpack.c.l.b16 %v271
        %v410 = vunpack.c.l.b16 %v272
        %v411 = vunpack.c.l.b16 %v273
        %v412 = vunpack.c.l.b16 %v274
        %v413 = vunpack.c.l.b16 %v275
        %v414 = vunpack.c.l.b16 %v276
        %v415 = vunpack.c.l.b16 %v277
        %v416 = vunpack.c.l.b16 %v278
        %v417 = vunpack.c.l.b16 %v279
        %v418 = vunpack.c.l.b16 %v280
        %v419 = vunpack.c.l.b16 %v281
        %v420 = vunpack.c.l.b16 %v282
        %v421 = vunpack.c.l.b16 %v283
        %v422 = vunpack.c.l.b16 %v284
        %v423 = vunpack.c.l.b16 %v285
        %v424 = vunpack.c.l.b16 %v286
        %v425 = vunpack.c.l.b16 %v287
        %v426 = vunpack.c.l.b16 %v288
        %v427 = vunpack.c.l.b16 %v289
        %v428 = vunpack.c.l.b16 %v290
        %v429 = vunpack.c.l.b16 %v291
        %v430 = vunpack.c.l.b16 %v292
        %v431 = vunpack.c.l.b16 %v293
        %v432 = vunpack.c.l.b16 %v294
        %v433 = vunpack.c.l.b16 %v295
        %v434 = vpack.c.b16 %v403, %v402
        %v435 = vpack.c.b16 %v405, %v404
        %v436 = vpack.c.b16 %v407, %v406
        %v437 = vpack.c.b16 %v409, %v408
        %v438 = vpack.c.b16 %v411, %v410
        %v439 = vpack.c.b16 %v413, %v412
        %v440 = vpack.c.b16 %v415, %v414
        %v441 = vpack.c.b16 %v417, %v416
        %v442 = vpack.c.b16 %v419, %v418
        %v443 = vpack.c.b16 %v421, %v420
        %v444 = vpack.c.b16 %v423, %v422
        %v445 = vpack.c.b16 %v425, %v424
        %v446 = vpack.c.b16 %v427, %v426
        %v447 = vpack.c.b16 %v429, %v428
        %v448 = vpack.c.b16 %v431, %v430
        %v449 = vpack.c.b16 %v433, %v432
        %466 = vmatpush.bf16.msra.mxu0 %v441
        %467 = vmatpush.bf16.msra.mxu0 %v440
        %468 = vmatpush.bf16.msra.mxu0 %v439
        %469 = vmatpush.bf16.msra.mxu0 %v438
        %470 = vmatpush.bf16.msra.mxu0 %v437
        %471 = vmatpush.bf16.msra.mxu0 %v436
        %472 = vmatpush.bf16.msra.mxu0 %v435
        %473 = vmatpush.bf16.msra.mxu0 %v434
        %474 = vmatmul.bf16.gmra.mxu0 %v342
        %v475 = vpop.f32.mrf.mxu0
        %v476 = vadd.f32 %v298, %v475
        %v477 = vpop.f32.mrf.mxu0
        %v478 = vadd.f32 %v298, %v477
        %479 = vmatmul.bf16.gmra.mxu0 %v344
        %v480 = vpop.f32.mrf.mxu0
        %v481 = vadd.f32 %v298, %v480
        %v482 = vpop.f32.mrf.mxu0
        %v483 = vadd.f32 %v298, %v482
        %484 = vmatmul.bf16.gmra.mxu0 %v346
        %v485 = vpop.f32.mrf.mxu0
        %v486 = vadd.f32 %v298, %v485
        %v487 = vpop.f32.mrf.mxu0
        %v488 = vadd.f32 %v298, %v487
        %489 = vmatmul.bf16.gmra.mxu0 %v348
        %v490 = vpop.f32.mrf.mxu0
        %v491 = vadd.f32 %v298, %v490
        %v492 = vpop.f32.mrf.mxu0
        %v493 = vadd.f32 %v298, %v492
        %494 = vmatmul.bf16.gmra.mxu0 %v350
        %v495 = vpop.f32.mrf.mxu0
        %v496 = vadd.f32 %v298, %v495
        %v497 = vpop.f32.mrf.mxu0
        %v498 = vadd.f32 %v298, %v497
        %499 = vmatmul.bf16.gmra.mxu0 %v352
        %v500 = vpop.f32.mrf.mxu0
        %v501 = vadd.f32 %v298, %v500
        %v502 = vpop.f32.mrf.mxu0
        %v503 = vadd.f32 %v298, %v502
        %504 = vmatmul.bf16.gmra.mxu0 %v354
        %v505 = vpop.f32.mrf.mxu0
        %v506 = vadd.f32 %v298, %v505
        %v507 = vpop.f32.mrf.mxu0
        %v508 = vadd.f32 %v298, %v507
        %509 = vdwg.mxu0
        %510 = vmatpush.bf16.msra.mxu0 %v449
        %511 = vmatpush.bf16.msra.mxu0 %v448
        %512 = vmatpush.bf16.msra.mxu0 %v447
        %513 = vmatpush.bf16.msra.mxu0 %v446
        %514 = vmatpush.bf16.msra.mxu0 %v445
        %515 = vmatpush.bf16.msra.mxu0 %v444
        %516 = vmatpush.bf16.msra.mxu0 %v443
        %517 = vmatpush.bf16.msra.mxu0 %v442
        %518 = vmatmul.bf16.gmra.mxu0 %v343
        %v519 = vpop.f32.mrf.mxu0
        %v520 = vadd.f32 %v476, %v519
        %v521 = vpop.f32.mrf.mxu0
        %v522 = vadd.f32 %v478, %v521
        %523 = vmatmul.bf16.gmra.mxu0 %v345
        %v524 = vpop.f32.mrf.mxu0
        %v525 = vadd.f32 %v481, %v524
        %v526 = vpop.f32.mrf.mxu0
        %v527 = vadd.f32 %v483, %v526
        %528 = vmatmul.bf16.gmra.mxu0 %v347
        %v529 = vpop.f32.mrf.mxu0
        %v530 = vadd.f32 %v486, %v529
        %v531 = vpop.f32.mrf.mxu0
        %v532 = vadd.f32 %v488, %v531
        %533 = vmatmul.bf16.gmra.mxu0 %v349
        %v534 = vpop.f32.mrf.mxu0
        %v535 = vadd.f32 %v491, %v534
        %v536 = vpop.f32.mrf.mxu0
        %v537 = vadd.f32 %v493, %v536
        %538 = vmatmul.bf16.gmra.mxu0 %v351
        %v539 = vpop.f32.mrf.mxu0
        %v540 = vadd.f32 %v496, %v539
        %v541 = vpop.f32.mrf.mxu0
        %v542 = vadd.f32 %v498, %v541
        %543 = vmatmul.bf16.gmra.mxu0 %v353
        %v544 = vpop.f32.mrf.mxu0
        %v545 = vadd.f32 %v501, %v544
        %v546 = vpop.f32.mrf.mxu0
        %v547 = vadd.f32 %v503, %v546
        %548 = vmatmul.bf16.gmra.mxu0 %v355
        %v549 = vpop.f32.mrf.mxu0
        %v550 = vadd.f32 %v506, %v549
        %v551 = vpop.f32.mrf.mxu0
        %v552 = vadd.f32 %v508, %v551
        %553 = vdwg.mxu0
        %v554 = vmax.f32 %v520, 0.0
        %v555 = vmax.f32 %v522, 0.0
        %v556 = vmax.f32 %v525, 0.0
        %v557 = vmax.f32 %v527, 0.0
        %v558 = vmax.f32 %v530, 0.0
        %v559 = vmax.f32 %v532, 0.0
        %v560 = vmax.f32 %v535, 0.0
        %v561 = vmax.f32 %v537, 0.0
        %v562 = vmax.f32 %v540, 0.0
        %v563 = vmax.f32 %v542, 0.0
        %v564 = vmax.f32 %v545, 0.0
        %v565 = vmax.f32 %v547, 0.0
        %v566 = vmax.f32 %v550, 0.0
        %v567 = vmax.f32 %v552, 0.0
        %v568 = vpack.c.bf16 %v554, %v554
        %v569 = vpack.c.bf16 %v555, %v555
        %v570 = vpack.c.bf16 %v556, %v556
        %v571 = vpack.c.bf16 %v557, %v557
        %v572 = vpack.c.bf16 %v558, %v558
        %v573 = vpack.c.bf16 %v559, %v559
        %v574 = vpack.c.bf16 %v560, %v560
        %v575 = vpack.c.bf16 %v561, %v561
        %v576 = vpack.c.bf16 %v562, %v562
        %v577 = vpack.c.bf16 %v563, %v563
        %v578 = vpack.c.bf16 %v564, %v564
        %v579 = vpack.c.bf16 %v565, %v565
        %v580 = vpack.c.bf16 %v566, %v566
        %v581 = vpack.c.bf16 %v567, %v567
        %vm582 = vcmask 125952
        %583 = vst.msk [vmem:[%s221] sm:$0xf] %vm582, %v568
        %584 = vst.msk [vmem:[%s221 + $0x4] sm:$0xf] %vm582, %v569
        %585 = vst.msk [vmem:[%s221 + $0x8] sm:$0xf] %vm582, %v570
        %586 = vst.msk [vmem:[%s221 + $0xc] sm:$0xf] %vm582, %v571
        %587 = vst.msk [vmem:[%s221 + $0x10] sm:$0xf] %vm582, %v572
        %588 = vst.msk [vmem:[%s221 + $0x14] sm:$0xf] %vm582, %v573
        %589 = vst.msk [vmem:[%s221 + $0x18] sm:$0xf] %vm582, %v574
        %590 = vst.msk [vmem:[%s221 + $0x1c] sm:$0xf] %vm582, %v575
        %591 = vst.msk [vmem:[%s221 + $0x20] sm:$0xf] %vm582, %v576
        %592 = vst.msk [vmem:[%s221 + $0x24] sm:$0xf] %vm582, %v577
        %593 = vst.msk [vmem:[%s221 + $0x28] sm:$0xf] %vm582, %v578
        %594 = vst.msk [vmem:[%s221 + $0x2c] sm:$0xf] %vm582, %v579
        %595 = vst.msk [vmem:[%s221 + $0x30] sm:$0xf] %vm582, %v580
        %596 = vst.msk [vmem:[%s221 + $0x34] sm:$0xf] %vm582, %v581
        %s597 = sand.u32 %s116, 1
        %s598 = sand.u32 %s116, 1
        %s599 = smul.addr %s598, 56
        %s600 = scalar_lea.vmem [#allocation2], %s599
        // Predicated region
        $region33: #{forward.3} parent=31 // pred_check
          %p601 = pneg %p126
        $region34: #{forward.3} parent=31 // pred_check_branch
          %603 = sbr.rel (%p601) target = $region36
        $region35: #{forward.3} parent=31 // pred_region
          %s604 = smul.u32 14, %s19
          %s605 = ssub.s32 13, %s604
          %s606 = smul.u32 4, %s605
          %p607 = scmp.ne.s32.totalorder 0, %s606
          %s608 = smul.addr %s18, 13
          %s609 = sadd.s32 %s604, %s608
          %s610 = smul.addr %s609, 4
          %s611 = scalar_lea.vmem %s3, %s610
          // Predicated region
          $region37: #{forward.3} parent=35 // pred_check
            %p612 = pneg %p607
          $region38: #{forward.3} parent=35 // pred_check_branch
            %614 = sbr.rel (%p612) target = $region40
          $region39: #{forward.3} parent=35 // pred_region
            // Predicated region
            $region41: #{forward.3} parent=39 // pred_check
              _
            $region42: #{forward.3} parent=39 // pred_check_branch
              %616 = sbr.rel target = $region44
            $region43: #{forward.3} parent=39 // pred_region
              // Predicated region
              $region63: #{forward.3} parent=43 // pred_check
                _
              $region64: #{forward.3} parent=43 // pred_check_branch
                %691 = sbr.rel (0) target = $region66
              $region65: #{forward.3} parent=43 // pred_region
                %s693 = ssub.s32 16, 1
                %s694 = sdiv.u32.pop %s605, 13
                %s695 = srem.u32.pop %s605, 13
                // While loop
                $region67: #{forward.3} parent=65 // loop_pre_header
                  _
                $region68: #{forward.3} parent=65 // loop_header
                  %s697 = sphi 0, %s699
                  %p698 = scmp.ge.s32.totalorder %s697, %s694
                  %s702 = sphi 0, %s733
                  %s703 = sphi %s600, %s736
                  %s704 = sphi %s611, %s737
                $region69: #{forward.3} parent=65 // loop_header_branch
                  %701 = sbr.rel (%p698) target = $region73
                $region70: #{forward.3} parent=65 // loop_body
                  %v705 = vld [vmem:[%s703] sm:%s693]
                  %706 = vst [vmem:[%s704] sm:%s693] %v705
                  %v707 = vld [vmem:[%s703 + $0x4] sm:%s693]
                  %708 = vst [vmem:[%s704 + $0x4] sm:%s693] %v707
                  %v709 = vld [vmem:[%s703 + $0x8] sm:%s693]
                  %710 = vst [vmem:[%s704 + $0x8] sm:%s693] %v709
                  %v711 = vld [vmem:[%s703 + $0xc] sm:%s693]
                  %712 = vst [vmem:[%s704 + $0xc] sm:%s693] %v711
                  %v713 = vld [vmem:[%s703 + $0x10] sm:%s693]
                  %714 = vst [vmem:[%s704 + $0x10] sm:%s693] %v713
                  %v715 = vld [vmem:[%s703 + $0x14] sm:%s693]
                  %716 = vst [vmem:[%s704 + $0x14] sm:%s693] %v715
                  %v717 = vld [vmem:[%s703 + $0x18] sm:%s693]
                  %718 = vst [vmem:[%s704 + $0x18] sm:%s693] %v717
                  %v719 = vld [vmem:[%s703 + $0x1c] sm:%s693]
                  %720 = vst [vmem:[%s704 + $0x1c] sm:%s693] %v719
                  %v721 = vld [vmem:[%s703 + $0x20] sm:%s693]
                  %722 = vst [vmem:[%s704 + $0x20] sm:%s693] %v721
                  %v723 = vld [vmem:[%s703 + $0x24] sm:%s693]
                  %724 = vst [vmem:[%s704 + $0x24] sm:%s693] %v723
                  %v725 = vld [vmem:[%s703 + $0x28] sm:%s693]
                  %726 = vst [vmem:[%s704 + $0x28] sm:%s693] %v725
                  %v727 = vld [vmem:[%s703 + $0x2c] sm:%s693]
                  %728 = vst [vmem:[%s704 + $0x2c] sm:%s693] %v727
                  %v729 = vld [vmem:[%s703 + $0x30] sm:%s693]
                  %730 = vst [vmem:[%s704 + $0x30] sm:%s693] %v729
                  %s731 = sadd.s32 1, %s702
                  %p732 = scmp.ge.s32.totalorder %s731, %s694
                  %s733 = scalar_select %p732, 0, %s731
                  %s734 = smul.u32 %s733, 52
                  %s735 = smul.u32 %s733, 52
                  %s736 = scalar_lea.vmem %s600, %s734 [#allocation2]
                  %s737 = scalar_lea.vmem %s611, %s735
                $region71: #{forward.3} parent=65 // loop_footer
                  %s699 = sadd.s32 %s697, 1
                $region72: #{forward.3} parent=65 // loop_footer_branch
                  %696 = sbr.rel target = $region68
                $region73: #{forward.3} parent=65 // loop_exit
                  _
                %s738 = sdiv.u32.pop %s605, 13
                %s739 = srem.u32.pop %s605, 13
                %s740 = smul.u32 %s738, 13
                %s741 = smul.u32 4, %s740
                %s742 = scalar_lea.vmem %s600, %s741 [#allocation2]
                %s743 = smul.u32 4, %s740
                %s744 = scalar_lea.vmem %s611, %s743
                // While loop
                $region74: #{forward.3} parent=65 // loop_pre_header
                  _
                $region75: #{forward.3} parent=65 // loop_header
                  %s746 = sphi 0, %s748
                  %p747 = scmp.ge.s32.totalorder %s746, %s739
                  %s751 = sphi 0, %s758
                  %s752 = sphi %s742, %s761
                  %s753 = sphi %s744, %s762
                $region76: #{forward.3} parent=65 // loop_header_branch
                  %750 = sbr.rel (%p747) target = $region80
                $region77: #{forward.3} parent=65 // loop_body
                  %v754 = vld [vmem:[%s752] sm:%s693]
                  %755 = vst [vmem:[%s753] sm:%s693] %v754
                  %s756 = sadd.s32 1, %s751
                  %p757 = scmp.ge.s32.totalorder %s756, %s739
                  %s758 = scalar_select %p757, 0, %s756
                  %s759 = smul.u32 %s758, 4
                  %s760 = smul.u32 %s758, 4
                  %s761 = scalar_lea.vmem %s742, %s759 [#allocation2]
                  %s762 = scalar_lea.vmem %s744, %s760
                $region78: #{forward.3} parent=65 // loop_footer
                  %s748 = sadd.s32 %s746, 1
                $region79: #{forward.3} parent=65 // loop_footer_branch
                  %745 = sbr.rel target = $region75
                $region80: #{forward.3} parent=65 // loop_exit
                  _
              $region66: #{forward.3} parent=43 // pred_fallthru
                _
            $region44: #{forward.3} parent=39 // pred_fallthru
              _
            // Predicated region
            $region45: #{forward.3} parent=39 // pred_check
              _
            $region46: #{forward.3} parent=39 // pred_check_branch
              %618 = sbr.rel (0) target = $region48
            $region47: #{forward.3} parent=39 // pred_region
              %s620 = ssub.s32 16, 1
              %s621 = sdiv.u32.pop %s605, 13
              %s622 = srem.u32.pop %s605, 13
              // While loop
              $region49: #{forward.3} parent=47 // loop_pre_header
                _
              $region50: #{forward.3} parent=47 // loop_header
                %s624 = sphi 0, %s626
                %p625 = scmp.ge.s32.totalorder %s624, %s621
                %s629 = sphi 0, %s660
                %s630 = sphi %s600, %s663
                %s631 = sphi %s611, %s664
              $region51: #{forward.3} parent=47 // loop_header_branch
                %628 = sbr.rel (%p625) target = $region55
              $region52: #{forward.3} parent=47 // loop_body
                %v632 = vld [vmem:[%s630] sm:%s620]
                %633 = vst [vmem:[%s631] sm:%s620] %v632
                %v634 = vld [vmem:[%s630 + $0x4] sm:%s620]
                %635 = vst [vmem:[%s631 + $0x4] sm:%s620] %v634
                %v636 = vld [vmem:[%s630 + $0x8] sm:%s620]
                %637 = vst [vmem:[%s631 + $0x8] sm:%s620] %v636
                %v638 = vld [vmem:[%s630 + $0xc] sm:%s620]
                %639 = vst [vmem:[%s631 + $0xc] sm:%s620] %v638
                %v640 = vld [vmem:[%s630 + $0x10] sm:%s620]
                %641 = vst [vmem:[%s631 + $0x10] sm:%s620] %v640
                %v642 = vld [vmem:[%s630 + $0x14] sm:%s620]
                %643 = vst [vmem:[%s631 + $0x14] sm:%s620] %v642
                %v644 = vld [vmem:[%s630 + $0x18] sm:%s620]
                %645 = vst [vmem:[%s631 + $0x18] sm:%s620] %v644
                %v646 = vld [vmem:[%s630 + $0x1c] sm:%s620]
                %647 = vst [vmem:[%s631 + $0x1c] sm:%s620] %v646
                %v648 = vld [vmem:[%s630 + $0x20] sm:%s620]
                %649 = vst [vmem:[%s631 + $0x20] sm:%s620] %v648
                %v650 = vld [vmem:[%s630 + $0x24] sm:%s620]
                %651 = vst [vmem:[%s631 + $0x24] sm:%s620] %v650
                %v652 = vld [vmem:[%s630 + $0x28] sm:%s620]
                %653 = vst [vmem:[%s631 + $0x28] sm:%s620] %v652
                %v654 = vld [vmem:[%s630 + $0x2c] sm:%s620]
                %655 = vst [vmem:[%s631 + $0x2c] sm:%s620] %v654
                %v656 = vld [vmem:[%s630 + $0x30] sm:%s620]
                %657 = vst [vmem:[%s631 + $0x30] sm:%s620] %v656
                %s658 = sadd.s32 1, %s629
                %p659 = scmp.ge.s32.totalorder %s658, %s621
                %s660 = scalar_select %p659, 0, %s658
                %s661 = smul.u32 %s660, 52
                %s662 = smul.u32 %s660, 52
                %s663 = scalar_lea.vmem %s600, %s661 [#allocation2]
                %s664 = scalar_lea.vmem %s611, %s662
              $region53: #{forward.3} parent=47 // loop_footer
                %s626 = sadd.s32 %s624, 1
              $region54: #{forward.3} parent=47 // loop_footer_branch
                %623 = sbr.rel target = $region50
              $region55: #{forward.3} parent=47 // loop_exit
                _
              %s665 = sdiv.u32.pop %s605, 13
              %s666 = srem.u32.pop %s605, 13
              %s667 = smul.u32 %s665, 13
              %s668 = smul.u32 4, %s667
              %s669 = scalar_lea.vmem %s600, %s668 [#allocation2]
              %s670 = smul.u32 4, %s667
              %s671 = scalar_lea.vmem %s611, %s670
              // While loop
              $region56: #{forward.3} parent=47 // loop_pre_header
                _
              $region57: #{forward.3} parent=47 // loop_header
                %s673 = sphi 0, %s675
                %p674 = scmp.ge.s32.totalorder %s673, %s666
                %s678 = sphi 0, %s685
                %s679 = sphi %s669, %s688
                %s680 = sphi %s671, %s689
              $region58: #{forward.3} parent=47 // loop_header_branch
                %677 = sbr.rel (%p674) target = $region62
              $region59: #{forward.3} parent=47 // loop_body
                %v681 = vld [vmem:[%s679] sm:%s620]
                %682 = vst [vmem:[%s680] sm:%s620] %v681
                %s683 = sadd.s32 1, %s678
                %p684 = scmp.ge.s32.totalorder %s683, %s666
                %s685 = scalar_select %p684, 0, %s683
                %s686 = smul.u32 %s685, 4
                %s687 = smul.u32 %s685, 4
                %s688 = scalar_lea.vmem %s669, %s686 [#allocation2]
                %s689 = scalar_lea.vmem %s671, %s687
              $region60: #{forward.3} parent=47 // loop_footer
                %s675 = sadd.s32 %s673, 1
              $region61: #{forward.3} parent=47 // loop_footer_branch
                %672 = sbr.rel target = $region57
              $region62: #{forward.3} parent=47 // loop_exit
                _
            $region48: #{forward.3} parent=39 // pred_fallthru
              _
          $region40: #{forward.3} parent=35 // pred_fallthru
            _
          %763 = vnop
        $region36: #{forward.3} parent=31 // pred_fallthru
          _
      $region32: #{forward.3} parent=5 // pred_fallthru
        _
      %p764 = scmp.le.s32.totalorder 2, %s9
      // Predicated region
      $region81: #{forward.3} parent=5 // pred_check
        %p765 = pneg %p764
      $region82: #{forward.3} parent=5 // pred_check_branch
        %767 = sbr.rel (%p765) target = $region84
      $region83: #{forward.3} parent=5 // pred_region
        %s768 = ssub.s32 %s9, 2
        // Predicated region
        $region85: #{forward.3} parent=83 // pred_check
          %p769 = pneg %p132
        $region86: #{forward.3} parent=83 // pred_check_branch
          %771 = sbr.rel (%p769) target = $region88
        $region87: #{forward.3} parent=83 // pred_region
          %s772 = sand.u32 %s117, 1
          %s773 = sand.u32 %s117, 1
          %s774 = smul.addr %s773, 56
          %s775 = scalar_lea.vmem [#allocation2], %s774
        $region88: #{forward.3} parent=83 // pred_fallthru
          _
      $region84: #{forward.3} parent=5 // pred_fallthru
        _
    $region6: #{forward.3} parent=1 // loop_footer
      %s13 = sadd.s32 1, %s9
    $region7: #{forward.3} parent=1 // loop_footer_branch
      %8 = sbr.rel target = $region3
    $region8: #{forward.3} parent=1 // loop_exit
      _

// kernel: squeeze.2
$region0: #{squeeze.2}
  %s0 = inlined_call_operand.vmem [shape: bf16[1,8,32], index: 0, kind: input, shape index: {}]
  %s1 = inlined_call_operand.vmem [shape: bf16[2,128], index: 1, kind: output, shape index: {}]
  $region1: #{squeeze.2} parent=0
    #allocation0 [shape = 'u8[4096]{0}', space=vmem, size = 0x1000, scoped, tag = 'scoped mem for output reshape']
    #allocation1 [shape = 'u8[4096]{0}', space=vmem, size = 0x1000, scoped, tag = 'scoped mem for input reshape']
    %s3 = ssub.s32 256, 1
    %s4 = sshrl.u32 %s3, 1
    %s5 = sor.u32 %s3, %s4
    %s6 = sand.u32 %s5, 85
    %s7 = sshrl.u32 %s6, 1
    %s8 = sor.u32 %s6, %s7
    %s9 = sand.u32 51, %s8
    %s10 = sshrl.u32 %s9, 2
    %s11 = sor.u32 %s9, %s10
    %s12 = sand.u32 15, %s11
    %v13 = vld [vmem:[%s0] sm:%s12]
    %v14 = vunpack.c.l.bf16 %v13
    %v15 = vunpack.c.h.bf16 %v13
    %16 = vst [vmem:[#allocation1] sm:%s3] %v14
    %s17 = smov 3
    %v18 = vld [vmem:[#allocation1] ss:$4 sm:%s17]
    %vm19 = vcmask 261120
    %20 = vst.msk [vmem:[#allocation0] sm:$0x3] %vm19, %v18
    %s21 = scalar_lea.vmem [#allocation1], 3
    %s22 = smov 3
    %v23 = vld [vmem:[%s21] ss:$4 sm:%s22]
    %24 = vrot.lane.b32.xlu0 %v23, 96
    %v25 = vpop.permute.xlu0 %24
    %vm26 = vcmask 1048320
    %27 = vst.msk [vmem:[#allocation0] sm:$0x3] %vm26, %v25
    %s28 = scalar_lea.vmem [#allocation1], 2
    %s29 = smov 3
    %v30 = vld [vmem:[%s28] ss:$4 sm:%s29]
    %31 = vrot.lane.b32.xlu0 %v30, 64
    %v32 = vpop.permute.xlu0 %31
    %vm33 = vcmask 785920
    %34 = vst.msk [vmem:[#allocation0] sm:$0x3] %vm33, %v32
    %s35 = scalar_lea.vmem [#allocation1], 1
    %s36 = smov 3
    %v37 = vld [vmem:[%s35] ss:$4 sm:%s36]
    %38 = vrot.lane.b32.xlu0 %v37, 32
    %v39 = vpop.permute.xlu0 %38
    %vm40 = vcmask 523520
    %41 = vst.msk [vmem:[#allocation0] sm:$0x3] %vm40, %v39
    %s43 = ssub.s32 4, 1
    %v44 = vld [vmem:[#allocation0] sm:%s43]
    %v45 = vpack.c.bf16 0.0, %v44
    %s47 = ssub.s32 2, 1
    %48 = vst [vmem:[%s1] sm:%s47] %v45

// kernel: forward.4
$region0: #{forward.4}
  #allocation0 [shape = 'u32[]', space=smem, size = 0x4, offset = 0x4, fixed_abs, tag = 'smem constant byte address 0x4 - core index']
  #allocation1 [shape = 'u32[72,128]{1,0:T(1,128)}', space=vmem, size = 0x9000, scoped, tag = 'internal scratch']
  %s0 = inlined_call_operand.vmem [shape: bf16[2,8,256], index: 0, kind: input, shape index: {}]
  %s1 = inlined_call_operand.vmem [shape: bf16[2,256,32], index: 1, kind: input, shape index: {}]
  %s2 = inlined_call_operand.vmem [shape: f32[2,1,32], index: 2, kind: input, shape index: {}]
  %s3 = inlined_call_operand.vmem [shape: bf16[2,8,32], index: 3, kind: output, shape index: {}]
  %s4 = sld [smem:[#allocation0]]
  $region75: #{forward.4} parent=0
    _
  %s6 = ssub.s32 1, %s4
  %s7 = scalar_select 0, %s6, %s4
  $region1: #{forward.4} parent=0
    #allocation2 [shape = 'u8[8192]{0}', space=vmem, size = 0x2000, scoped, tag = 'output window, operand 0']
    loop: start=0, step=1, limit=4
    $region2: #{forward.4} parent=1 // loop_pre_header
      _
    $region3: #{forward.4} parent=1 // loop_header
      %s9 = sphi 0, %s13
      %p10 = scmp.ge.s32.totalorder %s9, 4
      %s16 = sphi 0, %s28
      %s17 = sphi 0, %s24
      %s18 = sphi 0, %s16
      %s19 = sphi 0, %s17
      %s20 = sphi 0, %s18
      %s21 = sphi 0, %s19
      %s33 = sphi 0, %s35
      %s36 = sphi 0, %s33
      %s37 = sphi 0, %s36
      %s53 = sphi 0, %s37
      %s59 = sphi 0, %s61
      %s62 = sphi 0, %s59
      %s63 = sphi 0, %s62
      %s79 = sphi 0, %s63
      %s85 = sphi 0, %s87
      %s88 = sphi 0, %s85
      %s89 = sphi 0, %s88
      %s105 = sphi 0, %s89
      %s113 = sphi 0, %s115
      %s116 = sphi 0, %s113
      %s117 = sphi 0, %s116
      %s133 = sphi 0, %s117
    $region4: #{forward.4} parent=1 // loop_header_branch
      %12 = sbr.rel (%p10) target = $region8
    $region5: #{forward.4} parent=1 // loop_body
      %s14 = ssub.s32 %s9, 1
      %s15 = ssub.s32 %s9, 2
      %s22 = sadd.s32 1, %s17
      %p23 = scmp.ge.s32.totalorder %s22, 1
      %s24 = scalar_select %p23, 0, %s22
      %s25 = sadd.s32 1, %s16
      %s26 = scalar_select %p23, %s25, %s16
      %p27 = scmp.ge.s32.totalorder %s26, 2
      %s28 = scalar_select %p27, 0, %s26
      %s29 = ssub.s32 %s16, %s28
      %s30 = ssub.s32 %s17, %s24
      %s31 = sor.u32 %s29, %s30
      %p32 = scmp.eq.s32.totalorder %s31, 0
      %s34 = sadd.s32 %s33, 1
      %s35 = scalar_select %p32, %s33, %s34
      %p38 = pneg %p32
      %p39 = scmp.eq.s32.totalorder %s9, 1
      %p40 = por %p38, %p39
      %p41 = scmp.ne.s32.totalorder %s33, %s36
      %p42 = scmp.eq.s32.totalorder %s9, 0
      %p43 = por %p41, %p42
      %p44 = scmp.ne.s32.totalorder %s33, %s36
      %p45 = scmp.eq.s32.totalorder %s14, 1
      %p46 = por %p44, %p45
      %p47 = scmp.ne.s32.totalorder %s36, %s37
      %p48 = scmp.eq.s32.totalorder %s14, 0
      %p49 = por %p47, %p48
      %p50 = scmp.ne.s32.totalorder %s36, %s37
      %p51 = scmp.eq.s32.totalorder %s15, 1
      %p52 = por %p50, %p51
      %p54 = scmp.ne.s32.totalorder %s37, %s53
      %p55 = scmp.eq.s32.totalorder %s15, 0
      %p56 = por %p54, %p55
      %s57 = ssub.s32 %s16, %s28
      %p58 = scmp.eq.s32.totalorder %s57, 0
      %s60 = sadd.s32 %s59, 1
      %s61 = scalar_select %p58, %s59, %s60
      %p64 = pneg %p58
      %p65 = scmp.eq.s32.totalorder %s9, 1
      %p66 = por %p64, %p65
      %p67 = scmp.ne.s32.totalorder %s59, %s62
      %p68 = scmp.eq.s32.totalorder %s9, 0
      %p69 = por %p67, %p68
      %p70 = scmp.ne.s32.totalorder %s59, %s62
      %p71 = scmp.eq.s32.totalorder %s14, 1
      %p72 = por %p70, %p71
      %p73 = scmp.ne.s32.totalorder %s62, %s63
      %p74 = scmp.eq.s32.totalorder %s14, 0
      %p75 = por %p73, %p74
      %p76 = scmp.ne.s32.totalorder %s62, %s63
      %p77 = scmp.eq.s32.totalorder %s15, 1
      %p78 = por %p76, %p77
      %p80 = scmp.ne.s32.totalorder %s63, %s79
      %p81 = scmp.eq.s32.totalorder %s15, 0
      %p82 = por %p80, %p81
      %s83 = ssub.s32 %s16, %s28
      %p84 = scmp.eq.s32.totalorder %s83, 0
      %s86 = sadd.s32 %s85, 1
      %s87 = scalar_select %p84, %s85, %s86
      %p90 = pneg %p84
      %p91 = scmp.eq.s32.totalorder %s9, 1
      %p92 = por %p90, %p91
      %p93 = scmp.ne.s32.totalorder %s85, %s88
      %p94 = scmp.eq.s32.totalorder %s9, 0
      %p95 = por %p93, %p94
      %p96 = scmp.ne.s32.totalorder %s85, %s88
      %p97 = scmp.eq.s32.totalorder %s14, 1
      %p98 = por %p96, %p97
      %p99 = scmp.ne.s32.totalorder %s88, %s89
      %p100 = scmp.eq.s32.totalorder %s14, 0
      %p101 = por %p99, %p100
      %p102 = scmp.ne.s32.totalorder %s88, %s89
      %p103 = scmp.eq.s32.totalorder %s15, 1
      %p104 = por %p102, %p103
      %p106 = scmp.ne.s32.totalorder %s89, %s105
      %p107 = scmp.eq.s32.totalorder %s15, 0
      %p108 = por %p106, %p107
      %s109 = ssub.s32 %s16, %s28
      %s110 = ssub.s32 %s17, %s24
      %s111 = sor.u32 %s109, %s110
      %p112 = scmp.eq.s32.totalorder %s111, 0
      %s114 = sadd.s32 %s113, 1
      %s115 = scalar_select %p112, %s113, %s114
      %p118 = pneg %p112
      %p119 = scmp.eq.s32.totalorder %s9, 1
      %p120 = por %p118, %p119
      %p121 = scmp.ne.s32.totalorder %s113, %s116
      %p122 = scmp.eq.s32.totalorder %s9, 0
      %p123 = por %p121, %p122
      %p124 = scmp.ne.s32.totalorder %s113, %s116
      %p125 = scmp.eq.s32.totalorder %s14, 1
      %p126 = por %p124, %p125
      %p127 = scmp.ne.s32.totalorder %s116, %s117
      %p128 = scmp.eq.s32.totalorder %s14, 0
      %p129 = por %p127, %p128
      %p130 = scmp.ne.s32.totalorder %s116, %s117
      %p131 = scmp.eq.s32.totalorder %s15, 1
      %p132 = por %p130, %p131
      %p134 = scmp.ne.s32.totalorder %s117, %s133
      %p135 = scmp.eq.s32.totalorder %s15, 0
      %p136 = por %p134, %p135
      %p137 = scmp.le.s32.totalorder 1, %s9
      %p138 = scmp.lt.s32.totalorder %s9, 3
      %p139 = pnand %p137, %p138
      %p140 = pneg %p139
      // Predicated region
      $region9: #{forward.4} parent=5 // pred_check
        _
      $region10: #{forward.4} parent=5 // pred_check_branch
        %142 = sbr.rel (%p139) target = $region12
      $region11: #{forward.4} parent=5 // pred_region
        %s143 = ssub.s32 %s9, 1
      $region12: #{forward.4} parent=5 // pred_fallthru
        _
      %p144 = scmp.lt.s32.totalorder %s9, 2
      // Predicated region
      $region13: #{forward.4} parent=5 // pred_check
        %p145 = pneg %p144
      $region14: #{forward.4} parent=5 // pred_check_branch
        %147 = sbr.rel (%p145) target = $region16
      $region15: #{forward.4} parent=5 // pred_region
        // Predicated region
        $region17: #{forward.4} parent=15 // pred_check
          %p148 = pneg %p43
        $region18: #{forward.4} parent=15 // pred_check_branch
          %150 = sbr.rel (%p148) target = $region20
        $region19: #{forward.4} parent=15 // pred_region
          %s151 = smul.u32 2, %s17
          %s152 = ssub.s32 1, %s151
          %s153 = smul.u32 4, %s152
          %s154 = smul.u32 %s153, 2
          %p155 = scmp.lt.s32.totalorder %s16, 1
          %s156 = scalar_select %p155, %s16, 1
          %p157 = scmp.lt.s32.totalorder %s151, 0
          %s158 = scalar_select %p157, %s151, 0
          %s159 = smul.addr %s158, 2
          %s160 = smul.addr %s156, 2
          %s161 = sadd.s32 %s159, %s160
          %s162 = smul.addr %s161, 4
          %s163 = scalar_lea.vmem %s0, %s162
          %s164 = smul.u32 2, %s17
          %s165 = ssub.s32 1, %s164
          %s166 = smul.u32 4, %s165
          %s167 = smul.u32 %s166, 2
        $region20: #{forward.4} parent=15 // pred_fallthru
          _
        // Predicated region
        $region21: #{forward.4} parent=15 // pred_check
          %p168 = pneg %p69
        $region22: #{forward.4} parent=15 // pred_check_branch
          %170 = sbr.rel (%p168) target = $region24
        $region23: #{forward.4} parent=15 // pred_region
          %p171 = scmp.lt.s32.totalorder %s16, 1
          %s172 = scalar_select %p171, %s16, 1
          %s173 = smul.addr %s172, 32
          %s174 = smul.addr %s173, 4
          %s175 = scalar_lea.vmem %s1, %s174
        $region24: #{forward.4} parent=15 // pred_fallthru
          _
        // Predicated region
        $region25: #{forward.4} parent=15 // pred_check
          %p176 = pneg %p95
        $region26: #{forward.4} parent=15 // pred_check_branch
          %178 = sbr.rel (%p176) target = $region28
        $region27: #{forward.4} parent=15 // pred_region
          %p179 = scmp.lt.s32.totalorder %s16, 1
          %s180 = scalar_select %p179, %s16, 1
          %s181 = scalar_lea.vmem %s2, %s180
        $region28: #{forward.4} parent=15 // pred_fallthru
          _
      $region16: #{forward.4} parent=5 // pred_fallthru
        _
      %p182 = scmp.le.s32.totalorder 1, %s9
      %p183 = scmp.lt.s32.totalorder %s9, 3
      %p184 = pnand %p182, %p183
      %p185 = pneg %p184
      // Predicated region
      $region29: #{forward.4} parent=5 // pred_check
        _
      $region30: #{forward.4} parent=5 // pred_check_branch
        %187 = sbr.rel (%p184) target = $region32
      $region31: #{forward.4} parent=5 // pred_region
        %s188 = ssub.s32 %s9, 1
        %s189 = smul.u32 2, %s19
        %s190 = ssub.s32 1, %s189
        %s191 = smul.u32 4, %s190
        %s192 = smul.u32 %s191, 2
        %p193 = scmp.lt.s32.totalorder %s18, 1
        %s194 = scalar_select %p193, %s18, 1
        %p195 = scmp.lt.s32.totalorder %s189, 0
        %s196 = scalar_select %p195, %s189, 0
        %s197 = smul.addr %s196, 2
        %s198 = smul.addr %s194, 2
        %s199 = sadd.s32 %s197, %s198
        %s200 = smul.addr %s199, 4
        %s201 = scalar_lea.vmem %s0, %s200
        %p202 = pneg %p49
        %p203 = pneg %p46
        %p204 = scmp.lt.s32.totalorder %s18, 1
        %s205 = scalar_select %p204, %s18, 1
        %s206 = smul.addr %s205, 32
        %s207 = smul.addr %s206, 4
        %s208 = scalar_lea.vmem %s1, %s207
        %p209 = pneg %p75
        %p210 = pneg %p72
        %p211 = scmp.lt.s32.totalorder %s18, 1
        %s212 = scalar_select %p211, %s18, 1
        %s213 = scalar_lea.vmem %s2, %s212
        %p214 = pneg %p101
        %p215 = pneg %p98
        %p216 = pneg %p129
        %p217 = pneg %p126
        %s218 = sand.u32 %s116, 1
        %s219 = sand.u32 %s116, 1
        %s220 = smul.addr %s219, 8
        %s221 = scalar_lea.vmem [#allocation2], %s220
        %s222 = smul.u32 2, %s19
        %s223 = ssub.s32 1, %s222
        %s224 = smul.u32 4, %s223
        %s225 = smul.u32 %s224, 2
        %p226 = scmp.lt.s32.totalorder %s18, 1
        %s227 = scalar_select %p226, %s18, 1
        %p228 = scmp.lt.s32.totalorder %s222, 0
        %s229 = scalar_select %p228, %s222, 0
        %s230 = smul.addr %s229, 2
        %s231 = smul.addr %s227, 2
        %s232 = sadd.s32 %s230, %s231
        %s233 = smul.addr %s232, 4
        %s234 = scalar_lea.vmem %s0, %s233
        %s235 = smul.u32 2, %s19
        %s236 = ssub.s32 1, %s235
        %s237 = smul.u32 4, %s236
        %s238 = smul.u32 %s237, 2
        %p239 = scmp.lt.s32.totalorder %s18, 1
        %s240 = scalar_select %p239, %s18, 1
        %s241 = smul.addr %s240, 32
        %s242 = smul.addr %s241, 4
        %s243 = scalar_lea.vmem %s1, %s242
        %p244 = scmp.lt.s32.totalorder %s18, 1
        %s245 = scalar_select %p244, %s18, 1
        %s246 = scalar_lea.vmem %s2, %s245
        %s247 = smul.u32 2, %s19
        %s248 = ssub.s32 1, %s247
        %s249 = smul.u32 4, %s248
        %v250 = vld [vmem:[%s234] sm:$0xff]
        %v251 = vld [vmem:[%s234 + $0x8] sm:$0xff]
        %v252 = vld [vmem:[%s243] sm:$0xf]
        %v253 = vld [vmem:[%s243 + $0x4] sm:$0xf]
        %v254 = vld [vmem:[%s243 + $0x8] sm:$0xf]
        %v255 = vld [vmem:[%s243 + $0xc] sm:$0xf]
        %v256 = vld [vmem:[%s243 + $0x10] sm:$0xf]
        %v257 = vld [vmem:[%s243 + $0x14] sm:$0xf]
        %v258 = vld [vmem:[%s243 + $0x18] sm:$0xf]
        %v259 = vld [vmem:[%s243 + $0x1c] sm:$0xf]
        %v260 = vld [vmem:[%s243 + $0x20] sm:$0xf]
        %v261 = vld [vmem:[%s243 + $0x24] sm:$0xf]
        %v262 = vld [vmem:[%s243 + $0x28] sm:$0xf]
        %v263 = vld [vmem:[%s243 + $0x2c] sm:$0xf]
        %v264 = vld [vmem:[%s243 + $0x30] sm:$0xf]
        %v265 = vld [vmem:[%s243 + $0x34] sm:$0xf]
        %v266 = vld [vmem:[%s243 + $0x38] sm:$0xf]
        %v267 = vld [vmem:[%s243 + $0x3c] sm:$0xf]
        %v268 = vld [vmem:[%s243 + $0x40] sm:$0xf]
        %v269 = vld [vmem:[%s243 + $0x44] sm:$0xf]
        %v270 = vld [vmem:[%s243 + $0x48] sm:$0xf]
        %v271 = vld [vmem:[%s243 + $0x4c] sm:$0xf]
        %v272 = vld [vmem:[%s243 + $0x50] sm:$0xf]
        %v273 = vld [vmem:[%s243 + $0x54] sm:$0xf]
        %v274 = vld [vmem:[%s243 + $0x58] sm:$0xf]
        %v275 = vld [vmem:[%s243 + $0x5c] sm:$0xf]
        %v276 = vld [vmem:[%s243 + $0x60] sm:$0xf]
        %v277 = vld [vmem:[%s243 + $0x64] sm:$0xf]
        %v278 = vld [vmem:[%s243 + $0x68] sm:$0xf]
        %v279 = vld [vmem:[%s243 + $0x6c] sm:$0xf]
        %v280 = vld [vmem:[%s243 + $0x70] sm:$0xf]
        %v281 = vld [vmem:[%s243 + $0x74] sm:$0xf]
        %v282 = vld [vmem:[%s243 + $0x78] sm:$0xf]
        %v283 = vld [vmem:[%s243 + $0x7c] sm:$0xf]
        %v284 = vld [vmem:[%s246] sm:$0x1]
        %v286 = vperm.slane %v284, 0
        %v290 = vunpack.c.l.b16 %v250
        %v291 = vunpack.c.h.b16 %v250
        %v292 = vunpack.c.l.b16 %v251
        %v293 = vunpack.c.h.b16 %v251
        %v294 = vpack.c.b16 %v292, %v290
        %v295 = vpack.c.b16 %v293, %v291
        %v330 = vunpack.c.l.b16 %v252
        %v331 = vunpack.c.l.b16 %v253
        %v332 = vunpack.c.l.b16 %v254
        %v333 = vunpack.c.l.b16 %v255
        %v334 = vunpack.c.l.b16 %v256
        %v335 = vunpack.c.l.b16 %v257
        %v336 = vunpack.c.l.b16 %v258
        %v337 = vunpack.c.l.b16 %v259
        %v338 = vunpack.c.l.b16 %v260
        %v339 = vunpack.c.l.b16 %v261
        %v340 = vunpack.c.l.b16 %v262
        %v341 = vunpack.c.l.b16 %v263
        %v342 = vunpack.c.l.b16 %v264
        %v343 = vunpack.c.l.b16 %v265
        %v344 = vunpack.c.l.b16 %v266
        %v345 = vunpack.c.l.b16 %v267
        %v346 = vunpack.c.l.b16 %v268
        %v347 = vunpack.c.l.b16 %v269
        %v348 = vunpack.c.l.b16 %v270
        %v349 = vunpack.c.l.b16 %v271
        %v350 = vunpack.c.l.b16 %v272
        %v351 = vunpack.c.l.b16 %v273
        %v352 = vunpack.c.l.b16 %v274
        %v353 = vunpack.c.l.b16 %v275
        %v354 = vunpack.c.l.b16 %v276
        %v355 = vunpack.c.l.b16 %v277
        %v356 = vunpack.c.l.b16 %v278
        %v357 = vunpack.c.l.b16 %v279
        %v358 = vunpack.c.l.b16 %v280
        %v359 = vunpack.c.l.b16 %v281
        %v360 = vunpack.c.l.b16 %v282
        %v361 = vunpack.c.l.b16 %v283
        %v362 = vpack.c.b16 %v331, %v330
        %v363 = vpack.c.b16 %v333, %v332
        %v364 = vpack.c.b16 %v335, %v334
        %v365 = vpack.c.b16 %v337, %v336
        %v366 = vpack.c.b16 %v339, %v338
        %v367 = vpack.c.b16 %v341, %v340
        %v368 = vpack.c.b16 %v343, %v342
        %v369 = vpack.c.b16 %v345, %v344
        %v370 = vpack.c.b16 %v347, %v346
        %v371 = vpack.c.b16 %v349, %v348
        %v372 = vpack.c.b16 %v351, %v350
        %v373 = vpack.c.b16 %v353, %v352
        %v374 = vpack.c.b16 %v355, %v354
        %v375 = vpack.c.b16 %v357, %v356
        %v376 = vpack.c.b16 %v359, %v358
        %v377 = vpack.c.b16 %v361, %v360
        %394 = vmatpush.bf16.msra.mxu0 %v369
        %395 = vmatpush.bf16.msra.mxu0 %v368
        %396 = vmatpush.bf16.msra.mxu0 %v367
        %397 = vmatpush.bf16.msra.mxu0 %v366
        %398 = vmatpush.bf16.msra.mxu0 %v365
        %399 = vmatpush.bf16.msra.mxu0 %v364
        %400 = vmatpush.bf16.msra.mxu0 %v363
        %401 = vmatpush.bf16.msra.mxu0 %v362
        %402 = vmatmul.bf16.gmra.mxu0 %v294
        %v403 = vpop.f32.mrf.mxu0
        %v404 = vadd.f32 %v286, %v403
        %v405 = vpop.f32.mrf.mxu0
        %v406 = vadd.f32 %v286, %v405
        %407 = vdwg.mxu0
        %408 = vmatpush.bf16.msra.mxu0 %v377
        %409 = vmatpush.bf16.msra.mxu0 %v376
        %410 = vmatpush.bf16.msra.mxu0 %v375
        %411 = vmatpush.bf16.msra.mxu0 %v374
        %412 = vmatpush.bf16.msra.mxu0 %v373
        %413 = vmatpush.bf16.msra.mxu0 %v372
        %414 = vmatpush.bf16.msra.mxu0 %v371
        %415 = vmatpush.bf16.msra.mxu0 %v370
        %416 = vmatmul.bf16.gmra.mxu0 %v295
        %v417 = vpop.f32.mrf.mxu0
        %v418 = vadd.f32 %v404, %v417
        %v419 = vpop.f32.mrf.mxu0
        %v420 = vadd.f32 %v406, %v419
        %421 = vdwg.mxu0
        %v422 = vmax.f32 %v418, 0.0
        %v423 = vmax.f32 %v420, 0.0
        %v424 = vpack.c.bf16 %v422, %v422
        %v425 = vpack.c.bf16 %v423, %v423
        %vm426 = vcmask 257024
        %427 = vst.msk [vmem:[%s221] sm:$0xf] %vm426, %v424
        %428 = vst.msk [vmem:[%s221 + $0x4] sm:$0xf] %vm426, %v425
        %s429 = sand.u32 %s116, 1
        %s430 = sand.u32 %s116, 1
        %s431 = smul.addr %s430, 8
        %s432 = scalar_lea.vmem [#allocation2], %s431
        // Predicated region
        $region33: #{forward.4} parent=31 // pred_check
          %p433 = pneg %p126
        $region34: #{forward.4} parent=31 // pred_check_branch
          %435 = sbr.rel (%p433) target = $region36
        $region35: #{forward.4} parent=31 // pred_region
          %s436 = smul.u32 2, %s19
          %s437 = ssub.s32 1, %s436
          %s438 = smul.u32 4, %s437
          %p439 = scmp.ne.s32.totalorder 0, %s438
          %s440 = sadd.s32 %s436, %s18
          %s441 = smul.addr %s440, 4
          %s442 = scalar_lea.vmem %s3, %s441
          // Predicated region
          $region37: #{forward.4} parent=35 // pred_check
            %p443 = pneg %p439
          $region38: #{forward.4} parent=35 // pred_check_branch
            %445 = sbr.rel (%p443) target = $region40
          $region39: #{forward.4} parent=35 // pred_region
            // Predicated region
            $region41: #{forward.4} parent=39 // pred_check
              _
            $region42: #{forward.4} parent=39 // pred_check_branch
              %447 = sbr.rel target = $region44
            $region43: #{forward.4} parent=39 // pred_region
              // Predicated region
              $region56: #{forward.4} parent=43 // pred_check
                _
              $region57: #{forward.4} parent=43 // pred_check_branch
                %471 = sbr.rel (0) target = $region59
              $region58: #{forward.4} parent=43 // pred_region
                %s473 = ssub.s32 16, 1
                // While loop
                $region60: #{forward.4} parent=58 // loop_pre_header
                  _
                $region61: #{forward.4} parent=58 // loop_header
                  %s475 = sphi 0, %s477
                  %p476 = scmp.ge.s32.totalorder %s475, %s437
                  %s480 = sphi 0, %s487
                  %s481 = sphi %s432, %s490
                  %s482 = sphi %s442, %s491
                $region62: #{forward.4} parent=58 // loop_header_branch
                  %479 = sbr.rel (%p476) target = $region66
                $region63: #{forward.4} parent=58 // loop_body
                  %v483 = vld [vmem:[%s481] sm:%s473]
                  %484 = vst [vmem:[%s482] sm:%s473] %v483
                  %s485 = sadd.s32 1, %s480
                  %p486 = scmp.ge.s32.totalorder %s485, %s437
                  %s487 = scalar_select %p486, 0, %s485
                  %s488 = smul.u32 %s487, 4
                  %s489 = smul.u32 %s487, 4
                  %s490 = scalar_lea.vmem %s432, %s488 [#allocation2]
                  %s491 = scalar_lea.vmem %s442, %s489
                $region64: #{forward.4} parent=58 // loop_footer
                  %s477 = sadd.s32 %s475, 1
                $region65: #{forward.4} parent=58 // loop_footer_branch
                  %474 = sbr.rel target = $region61
                $region66: #{forward.4} parent=58 // loop_exit
                  _
              $region59: #{forward.4} parent=43 // pred_fallthru
                _
            $region44: #{forward.4} parent=39 // pred_fallthru
              _
            // Predicated region
            $region45: #{forward.4} parent=39 // pred_check
              _
            $region46: #{forward.4} parent=39 // pred_check_branch
              %449 = sbr.rel (0) target = $region48
            $region47: #{forward.4} parent=39 // pred_region
              %s451 = ssub.s32 16, 1
              // While loop
              $region49: #{forward.4} parent=47 // loop_pre_header
                _
              $region50: #{forward.4} parent=47 // loop_header
                %s453 = sphi 0, %s455
                %p454 = scmp.ge.s32.totalorder %s453, %s437
                %s458 = sphi 0, %s465
                %s459 = sphi %s432, %s468
                %s460 = sphi %s442, %s469
              $region51: #{forward.4} parent=47 // loop_header_branch
                %457 = sbr.rel (%p454) target = $region55
              $region52: #{forward.4} parent=47 // loop_body
                %v461 = vld [vmem:[%s459] sm:%s451]
                %462 = vst [vmem:[%s460] sm:%s451] %v461
                %s463 = sadd.s32 1, %s458
                %p464 = scmp.ge.s32.totalorder %s463, %s437
                %s465 = scalar_select %p464, 0, %s463
                %s466 = smul.u32 %s465, 4
                %s467 = smul.u32 %s465, 4
                %s468 = scalar_lea.vmem %s432, %s466 [#allocation2]
                %s469 = scalar_lea.vmem %s442, %s467
              $region53: #{forward.4} parent=47 // loop_footer
                %s455 = sadd.s32 %s453, 1
              $region54: #{forward.4} parent=47 // loop_footer_branch
                %452 = sbr.rel target = $region50
              $region55: #{forward.4} parent=47 // loop_exit
                _
            $region48: #{forward.4} parent=39 // pred_fallthru
              _
          $region40: #{forward.4} parent=35 // pred_fallthru
            _
          %492 = vnop
        $region36: #{forward.4} parent=31 // pred_fallthru
          _
      $region32: #{forward.4} parent=5 // pred_fallthru
        _
      %p493 = scmp.le.s32.totalorder 2, %s9
      // Predicated region
      $region67: #{forward.4} parent=5 // pred_check
        %p494 = pneg %p493
      $region68: #{forward.4} parent=5 // pred_check_branch
        %496 = sbr.rel (%p494) target = $region70
      $region69: #{forward.4} parent=5 // pred_region
        %s497 = ssub.s32 %s9, 2
        // Predicated region
        $region71: #{forward.4} parent=69 // pred_check
          %p498 = pneg %p132
        $region72: #{forward.4} parent=69 // pred_check_branch
          %500 = sbr.rel (%p498) target = $region74
        $region73: #{forward.4} parent=69 // pred_region
          %s501 = sand.u32 %s117, 1
          %s502 = sand.u32 %s117, 1
          %s503 = smul.addr %s502, 8
          %s504 = scalar_lea.vmem [#allocation2], %s503
        $region74: #{forward.4} parent=69 // pred_fallthru
          _
      $region70: #{forward.4} parent=5 // pred_fallthru
        _
    $region6: #{forward.4} parent=1 // loop_footer
      %s13 = sadd.s32 1, %s9
    $region7: #{forward.4} parent=1 // loop_footer_branch
      %8 = sbr.rel target = $region3
    $region8: #{forward.4} parent=1 // loop_exit
      _

// kernel: forward.5
$region0: #{forward.5}
  #allocation0 [shape = 'u32[]', space=smem, size = 0x4, offset = 0x4, fixed_abs, tag = 'smem constant byte address 0x4 - core index']
  #allocation1 [shape = 'u32[72,128]{1,0:T(1,128)}', space=vmem, size = 0x9000, scoped, tag = 'internal scratch']
  %s0 = inlined_call_operand.vmem [shape: bf16[2,128], index: 0, kind: input, shape index: {}]
  %s1 = inlined_call_operand.vmem [shape: bf16[2,128], index: 1, kind: input, shape index: {}]
  %s2 = inlined_call_operand.vmem [shape: bf16[2,128], index: 2, kind: input, shape index: {}]
  %s3 = inlined_call_operand.vmem [shape: bf16[128,256], index: 3, kind: input, shape index: {}]
  %s4 = inlined_call_operand.vmem [shape: f32[1,256], index: 4, kind: input, shape index: {}]
  %s5 = inlined_call_operand.vmem [shape: bf16[128,256], index: 5, kind: input, shape index: {}]
  %s6 = inlined_call_operand.vmem [shape: bf16[128,256], index: 6, kind: input, shape index: {}]
  %s7 = inlined_call_operand.vmem [shape: bf16[256,256], index: 7, kind: input, shape index: {}]
  %s8 = inlined_call_operand.vmem [shape: f32[1,256], index: 8, kind: input, shape index: {}]
  %s9 = inlined_call_operand.vmem [shape: bf16[256,256], index: 9, kind: input, shape index: {}]
  %s10 = inlined_call_operand.vmem [shape: f32[1,256], index: 10, kind: input, shape index: {}]
  %s11 = inlined_call_operand.vmem [shape: f32[1,256], index: 11, kind: input, shape index: {}]
  %s12 = inlined_call_operand.vmem [shape: f32[1,256], index: 12, kind: input, shape index: {}]
  %s13 = inlined_call_operand.vmem [shape: f32[2,256], index: 13, kind: output, shape index: {}]
  %s14 = sld [smem:[#allocation0]]
  $region92: #{forward.5} parent=0
    _
  %s16 = ssub.s32 1, %s14
  %s17 = scalar_select 0, %s16, %s14
  $region1: #{forward.5} parent=0
    #allocation2 [shape = 'u8[16384]{0}', space=vmem, size = 0x4000, scoped, tag = 'output window, operand 0, single buffered']
    // Predicated region
    $region2: #{forward.5} parent=1 // pred_check
      _
    $region3: #{forward.5} parent=1 // pred_check_branch
      %19 = sbr.rel (0) target = $region5
    $region4: #{forward.5} parent=1 // pred_region
      _
    $region5: #{forward.5} parent=1 // pred_fallthru
      _
    // Predicated region
    $region6: #{forward.5} parent=1 // pred_check
      _
    $region7: #{forward.5} parent=1 // pred_check_branch
      %21 = sbr.rel (0) target = $region9
    $region8: #{forward.5} parent=1 // pred_region
      _
    $region9: #{forward.5} parent=1 // pred_fallthru
      _
    // Predicated region
    $region10: #{forward.5} parent=1 // pred_check
      _
    $region11: #{forward.5} parent=1 // pred_check_branch
      %23 = sbr.rel (0) target = $region13
    $region12: #{forward.5} parent=1 // pred_region
      _
    $region13: #{forward.5} parent=1 // pred_fallthru
      _
    // Predicated region
    $region14: #{forward.5} parent=1 // pred_check
      _
    $region15: #{forward.5} parent=1 // pred_check_branch
      %25 = sbr.rel (0) target = $region17
    $region16: #{forward.5} parent=1 // pred_region
      _
    $region17: #{forward.5} parent=1 // pred_fallthru
      _
    // Predicated region
    $region18: #{forward.5} parent=1 // pred_check
      _
    $region19: #{forward.5} parent=1 // pred_check_branch
      %27 = sbr.rel (0) target = $region21
    $region20: #{forward.5} parent=1 // pred_region
      _
    $region21: #{forward.5} parent=1 // pred_fallthru
      _
    // Predicated region
    $region22: #{forward.5} parent=1 // pred_check
      _
    $region23: #{forward.5} parent=1 // pred_check_branch
      %29 = sbr.rel (0) target = $region25
    $region24: #{forward.5} parent=1 // pred_region
      _
    $region25: #{forward.5} parent=1 // pred_fallthru
      _
    // Predicated region
    $region26: #{forward.5} parent=1 // pred_check
      _
    $region27: #{forward.5} parent=1 // pred_check_branch
      %31 = sbr.rel (0) target = $region29
    $region28: #{forward.5} parent=1 // pred_region
      _
    $region29: #{forward.5} parent=1 // pred_fallthru
      _
    // Predicated region
    $region30: #{forward.5} parent=1 // pred_check
      _
    $region31: #{forward.5} parent=1 // pred_check_branch
      %33 = sbr.rel (0) target = $region33
    $region32: #{forward.5} parent=1 // pred_region
      _
    $region33: #{forward.5} parent=1 // pred_fallthru
      _
    // Predicated region
    $region34: #{forward.5} parent=1 // pred_check
      _
    $region35: #{forward.5} parent=1 // pred_check_branch
      %35 = sbr.rel (0) target = $region37
    $region36: #{forward.5} parent=1 // pred_region
      _
    $region37: #{forward.5} parent=1 // pred_fallthru
      _
    // Predicated region
    $region38: #{forward.5} parent=1 // pred_check
      _
    $region39: #{forward.5} parent=1 // pred_check_branch
      %37 = sbr.rel (0) target = $region41
    $region40: #{forward.5} parent=1 // pred_region
      _
    $region41: #{forward.5} parent=1 // pred_fallthru
      _
    // Predicated region
    $region42: #{forward.5} parent=1 // pred_check
      _
    $region43: #{forward.5} parent=1 // pred_check_branch
      %39 = sbr.rel (0) target = $region45
    $region44: #{forward.5} parent=1 // pred_region
      _
    $region45: #{forward.5} parent=1 // pred_fallthru
      _
    // Predicated region
    $region46: #{forward.5} parent=1 // pred_check
      _
    $region47: #{forward.5} parent=1 // pred_check_branch
      %41 = sbr.rel (0) target = $region49
    $region48: #{forward.5} parent=1 // pred_region
      _
    $region49: #{forward.5} parent=1 // pred_fallthru
      _
    // Predicated region
    $region50: #{forward.5} parent=1 // pred_check
      _
    $region51: #{forward.5} parent=1 // pred_check_branch
      %43 = sbr.rel (0) target = $region53
    $region52: #{forward.5} parent=1 // pred_region
      _
    $region53: #{forward.5} parent=1 // pred_fallthru
      _
    %v44 = vld [vmem:[%s2] sm:$0x1]
    %v45 = vld [vmem:[%s2 + $0x1] sm:$0x1]
    %v46 = vld [vmem:[%s2 + $0x2] sm:$0x1]
    %v47 = vld [vmem:[%s2 + $0x3] sm:$0x1]
    %v48 = vld [vmem:[%s2 + $0x4] sm:$0x1]
    %v49 = vld [vmem:[%s2 + $0x5] sm:$0x1]
    %v50 = vld [vmem:[%s2 + $0x6] sm:$0x1]
    %v51 = vld [vmem:[%s2 + $0x7] sm:$0x1]
    %v52 = vld [vmem:[%s3] sm:$0xff]
    %v53 = vld [vmem:[%s3 + $0x8] sm:$0xff]
    %v54 = vld [vmem:[%s3 + $0x10] sm:$0xff]
    %v55 = vld [vmem:[%s3 + $0x18] sm:$0xff]
    %v56 = vld [vmem:[%s3 + $0x20] sm:$0xff]
    %v57 = vld [vmem:[%s3 + $0x28] sm:$0xff]
    %v58 = vld [vmem:[%s3 + $0x30] sm:$0xff]
    %v59 = vld [vmem:[%s3 + $0x38] sm:$0xff]
    %v60 = vld [vmem:[%s3 + $0x40] sm:$0xff]
    %v61 = vld [vmem:[%s3 + $0x48] sm:$0xff]
    %v62 = vld [vmem:[%s3 + $0x50] sm:$0xff]
    %v63 = vld [vmem:[%s3 + $0x58] sm:$0xff]
    %v64 = vld [vmem:[%s3 + $0x60] sm:$0xff]
    %v65 = vld [vmem:[%s3 + $0x68] sm:$0xff]
    %v66 = vld [vmem:[%s3 + $0x70] sm:$0xff]
    %v67 = vld [vmem:[%s3 + $0x78] sm:$0xff]
    %v68 = vld [vmem:[%s4] sm:$0x3]
    %v70 = vperm.slane %v68, 0
    %v71 = vperm.slane %v68, 1
    %75 = vst [vmem:[#allocation1] ss:$9 sm:$0xff] %v44
    %s77 = scalar_lea.vmem [#allocation1], 1
    %78 = vst [vmem:[%s77] ss:$9 sm:$0xff] %v45
    %s80 = scalar_lea.vmem [#allocation1], 2
    %81 = vst [vmem:[%s80] ss:$9 sm:$0xff] %v46
    %s83 = scalar_lea.vmem [#allocation1], 3
    %84 = vst [vmem:[%s83] ss:$9 sm:$0xff] %v47
    %s86 = scalar_lea.vmem [#allocation1], 4
    %87 = vst [vmem:[%s86] ss:$9 sm:$0xff] %v48
    %s89 = scalar_lea.vmem [#allocation1], 5
    %90 = vst [vmem:[%s89] ss:$9 sm:$0xff] %v49
    %s92 = scalar_lea.vmem [#allocation1], 6
    %93 = vst [vmem:[%s92] ss:$9 sm:$0xff] %v50
    %s95 = scalar_lea.vmem [#allocation1], 7
    %96 = vst [vmem:[%s95] ss:$9 sm:$0xff] %v51
    %v97 = vld [vmem:[#allocation1] sm:$0xff]
    %v115 = vunpack.c.l.b16 %v52
    %v116 = vunpack.c.h.b16 %v52
    %v117 = vunpack.c.l.b16 %v53
    %v118 = vunpack.c.h.b16 %v53
    %v119 = vunpack.c.l.b16 %v54
    %v120 = vunpack.c.h.b16 %v54
    %v121 = vunpack.c.l.b16 %v55
    %v122 = vunpack.c.h.b16 %v55
    %v123 = vunpack.c.l.b16 %v56
    %v124 = vunpack.c.h.b16 %v56
    %v125 = vunpack.c.l.b16 %v57
    %v126 = vunpack.c.h.b16 %v57
    %v127 = vunpack.c.l.b16 %v58
    %v128 = vunpack.c.h.b16 %v58
    %v129 = vunpack.c.l.b16 %v59
    %v130 = vunpack.c.h.b16 %v59
    %v131 = vunpack.c.l.b16 %v60
    %v132 = vunpack.c.h.b16 %v60
    %v133 = vunpack.c.l.b16 %v61
    %v134 = vunpack.c.h.b16 %v61
    %v135 = vunpack.c.l.b16 %v62
    %v136 = vunpack.c.h.b16 %v62
    %v137 = vunpack.c.l.b16 %v63
    %v138 = vunpack.c.h.b16 %v63
    %v139 = vunpack.c.l.b16 %v64
    %v140 = vunpack.c.h.b16 %v64
    %v141 = vunpack.c.l.b16 %v65
    %v142 = vunpack.c.h.b16 %v65
    %v143 = vunpack.c.l.b16 %v66
    %v144 = vunpack.c.h.b16 %v66
    %v145 = vunpack.c.l.b16 %v67
    %v146 = vunpack.c.h.b16 %v67
    %v147 = vpack.c.b16 %v117, %v115
    %v148 = vpack.c.b16 %v118, %v116
    %v149 = vpack.c.b16 %v121, %v119
    %v150 = vpack.c.b16 %v122, %v120
    %v151 = vpack.c.b16 %v125, %v123
    %v152 = vpack.c.b16 %v126, %v124
    %v153 = vpack.c.b16 %v129, %v127
    %v154 = vpack.c.b16 %v130, %v128
    %v155 = vpack.c.b16 %v133, %v131
    %v156 = vpack.c.b16 %v134, %v132
    %v157 = vpack.c.b16 %v137, %v135
    %v158 = vpack.c.b16 %v138, %v136
    %v159 = vpack.c.b16 %v141, %v139
    %v160 = vpack.c.b16 %v142, %v140
    %v161 = vpack.c.b16 %v145, %v143
    %v162 = vpack.c.b16 %v146, %v144
    %179 = vmatpush.bf16.msra.mxu0 %v161
    %180 = vmatpush.bf16.msra.mxu0 %v159
    %181 = vmatpush.bf16.msra.mxu0 %v157
    %182 = vmatpush.bf16.msra.mxu0 %v155
    %183 = vmatpush.bf16.msra.mxu0 %v153
    %184 = vmatpush.bf16.msra.mxu0 %v151
    %185 = vmatpush.bf16.msra.mxu0 %v149
    %186 = vmatpush.bf16.msra.mxu0 %v147
    %187 = vmatmul.bf16.gmra.mxu0 %v97
    %v188 = vpop.f32.mrf.mxu0
    %v189 = vadd.f32 %v70, %v188
    %v190 = vpop.f32.mrf.mxu0
    %v191 = vadd.f32 %v70, %v190
    %192 = vdwg.mxu0
    %193 = vmatpush.bf16.msra.mxu0 %v162
    %194 = vmatpush.bf16.msra.mxu0 %v160
    %195 = vmatpush.bf16.msra.mxu0 %v158
    %196 = vmatpush.bf16.msra.mxu0 %v156
    %197 = vmatpush.bf16.msra.mxu0 %v154
    %198 = vmatpush.bf16.msra.mxu0 %v152
    %199 = vmatpush.bf16.msra.mxu0 %v150
    %200 = vmatpush.bf16.msra.mxu0 %v148
    %201 = vmatmul.bf16.gmra.mxu0 %v97
    %v202 = vpop.f32.mrf.mxu0
    %v203 = vadd.f32 %v71, %v202
    %v204 = vpop.f32.mrf.mxu0
    %v205 = vadd.f32 %v71, %v204
    %206 = vdwg.mxu0
    %v207 = vtanh.pop %v189
    %v208 = vtanh.pop %v203
    %v209 = vtanh.pop %v191
    %v210 = vtanh.pop %v205
    %v211 = vld [vmem:[%s0] sm:$0x1]
    %v212 = vld [vmem:[%s0 + $0x1] sm:$0x1]
    %v213 = vld [vmem:[%s0 + $0x2] sm:$0x1]
    %v214 = vld [vmem:[%s0 + $0x3] sm:$0x1]
    %v215 = vld [vmem:[%s0 + $0x4] sm:$0x1]
    %v216 = vld [vmem:[%s0 + $0x5] sm:$0x1]
    %v217 = vld [vmem:[%s0 + $0x6] sm:$0x1]
    %v218 = vld [vmem:[%s0 + $0x7] sm:$0x1]
    %v219 = vld [vmem:[%s5] sm:$0xff]
    %v220 = vld [vmem:[%s5 + $0x8] sm:$0xff]
    %v221 = vld [vmem:[%s5 + $0x10] sm:$0xff]
    %v222 = vld [vmem:[%s5 + $0x18] sm:$0xff]
    %v223 = vld [vmem:[%s5 + $0x20] sm:$0xff]
    %v224 = vld [vmem:[%s5 + $0x28] sm:$0xff]
    %v225 = vld [vmem:[%s5 + $0x30] sm:$0xff]
    %v226 = vld [vmem:[%s5 + $0x38] sm:$0xff]
    %v227 = vld [vmem:[%s5 + $0x40] sm:$0xff]
    %v228 = vld [vmem:[%s5 + $0x48] sm:$0xff]
    %v229 = vld [vmem:[%s5 + $0x50] sm:$0xff]
    %v230 = vld [vmem:[%s5 + $0x58] sm:$0xff]
    %v231 = vld [vmem:[%s5 + $0x60] sm:$0xff]
    %v232 = vld [vmem:[%s5 + $0x68] sm:$0xff]
    %v233 = vld [vmem:[%s5 + $0x70] sm:$0xff]
    %v234 = vld [vmem:[%s5 + $0x78] sm:$0xff]
    %v235 = vld [vmem:[%s1] sm:$0x1]
    %v236 = vld [vmem:[%s1 + $0x1] sm:$0x1]
    %v237 = vld [vmem:[%s1 + $0x2] sm:$0x1]
    %v238 = vld [vmem:[%s1 + $0x3] sm:$0x1]
    %v239 = vld [vmem:[%s1 + $0x4] sm:$0x1]
    %v240 = vld [vmem:[%s1 + $0x5] sm:$0x1]
    %v241 = vld [vmem:[%s1 + $0x6] sm:$0x1]
    %v242 = vld [vmem:[%s1 + $0x7] sm:$0x1]
    %v243 = vld [vmem:[%s6] sm:$0xff]
    %v244 = vld [vmem:[%s6 + $0x8] sm:$0xff]
    %v245 = vld [vmem:[%s6 + $0x10] sm:$0xff]
    %v246 = vld [vmem:[%s6 + $0x18] sm:$0xff]
    %v247 = vld [vmem:[%s6 + $0x20] sm:$0xff]
    %v248 = vld [vmem:[%s6 + $0x28] sm:$0xff]
    %v249 = vld [vmem:[%s6 + $0x30] sm:$0xff]
    %v250 = vld [vmem:[%s6 + $0x38] sm:$0xff]
    %v251 = vld [vmem:[%s6 + $0x40] sm:$0xff]
    %v252 = vld [vmem:[%s6 + $0x48] sm:$0xff]
    %v253 = vld [vmem:[%s6 + $0x50] sm:$0xff]
    %v254 = vld [vmem:[%s6 + $0x58] sm:$0xff]
    %v255 = vld [vmem:[%s6 + $0x60] sm:$0xff]
    %v256 = vld [vmem:[%s6 + $0x68] sm:$0xff]
    %v257 = vld [vmem:[%s6 + $0x70] sm:$0xff]
    %v258 = vld [vmem:[%s6 + $0x78] sm:$0xff]
    %260 = vst [vmem:[#allocation1] ss:$9 sm:$0xff] %v235
    %s262 = scalar_lea.vmem [#allocation1], 1
    %263 = vst [vmem:[%s262] ss:$9 sm:$0xff] %v236
    %s265 = scalar_lea.vmem [#allocation1], 2
    %266 = vst [vmem:[%s265] ss:$9 sm:$0xff] %v237
    %s268 = scalar_lea.vmem [#allocation1], 3
    %269 = vst [vmem:[%s268] ss:$9 sm:$0xff] %v238
    %s271 = scalar_lea.vmem [#allocation1], 4
    %272 = vst [vmem:[%s271] ss:$9 sm:$0xff] %v239
    %s274 = scalar_lea.vmem [#allocation1], 5
    %275 = vst [vmem:[%s274] ss:$9 sm:$0xff] %v240
    %s277 = scalar_lea.vmem [#allocation1], 6
    %278 = vst [vmem:[%s277] ss:$9 sm:$0xff] %v241
    %s280 = scalar_lea.vmem [#allocation1], 7
    %281 = vst [vmem:[%s280] ss:$9 sm:$0xff] %v242
    %v282 = vld [vmem:[#allocation1] sm:$0xff]
    %v300 = vunpack.c.l.b16 %v243
    %v301 = vunpack.c.h.b16 %v243
    %v302 = vunpack.c.l.b16 %v244
    %v303 = vunpack.c.h.b16 %v244
    %v304 = vunpack.c.l.b16 %v245
    %v305 = vunpack.c.h.b16 %v245
    %v306 = vunpack.c.l.b16 %v246
    %v307 = vunpack.c.h.b16 %v246
    %v308 = vunpack.c.l.b16 %v247
    %v309 = vunpack.c.h.b16 %v247
    %v310 = vunpack.c.l.b16 %v248
    %v311 = vunpack.c.h.b16 %v248
    %v312 = vunpack.c.l.b16 %v249
    %v313 = vunpack.c.h.b16 %v249
    %v314 = vunpack.c.l.b16 %v250
    %v315 = vunpack.c.h.b16 %v250
    %v316 = vunpack.c.l.b16 %v251
    %v317 = vunpack.c.h.b16 %v251
    %v318 = vunpack.c.l.b16 %v252
    %v319 = vunpack.c.h.b16 %v252
    %v320 = vunpack.c.l.b16 %v253
    %v321 = vunpack.c.h.b16 %v253
    %v322 = vunpack.c.l.b16 %v254
    %v323 = vunpack.c.h.b16 %v254
    %v324 = vunpack.c.l.b16 %v255
    %v325 = vunpack.c.h.b16 %v255
    %v326 = vunpack.c.l.b16 %v256
    %v327 = vunpack.c.h.b16 %v256
    %v328 = vunpack.c.l.b16 %v257
    %v329 = vunpack.c.h.b16 %v257
    %v330 = vunpack.c.l.b16 %v258
    %v331 = vunpack.c.h.b16 %v258
    %v332 = vpack.c.b16 %v302, %v300
    %v333 = vpack.c.b16 %v303, %v301
    %v334 = vpack.c.b16 %v306, %v304
    %v335 = vpack.c.b16 %v307, %v305
    %v336 = vpack.c.b16 %v310, %v308
    %v337 = vpack.c.b16 %v311, %v309
    %v338 = vpack.c.b16 %v314, %v312
    %v339 = vpack.c.b16 %v315, %v313
    %v340 = vpack.c.b16 %v318, %v316
    %v341 = vpack.c.b16 %v319, %v317
    %v342 = vpack.c.b16 %v322, %v320
    %v343 = vpack.c.b16 %v323, %v321
    %v344 = vpack.c.b16 %v326, %v324
    %v345 = vpack.c.b16 %v327, %v325
    %v346 = vpack.c.b16 %v330, %v328
    %v347 = vpack.c.b16 %v331, %v329
    %364 = vmatpush.bf16.msra.mxu0 %v346
    %365 = vmatpush.bf16.msra.mxu0 %v344
    %366 = vmatpush.bf16.msra.mxu0 %v342
    %367 = vmatpush.bf16.msra.mxu0 %v340
    %368 = vmatpush.bf16.msra.mxu0 %v338
    %369 = vmatpush.bf16.msra.mxu0 %v336
    %370 = vmatpush.bf16.msra.mxu0 %v334
    %371 = vmatpush.bf16.msra.mxu0 %v332
    %372 = vmatmul.bf16.gmra.mxu0 %v282
    %v373 = vpop.f32.mrf.mxu0
    %v374 = vadd.f32 0.0, %v373
    %v375 = vpop.f32.mrf.mxu0
    %v376 = vadd.f32 0.0, %v375
    %377 = vdwg.mxu0
    %378 = vmatpush.bf16.msra.mxu0 %v347
    %379 = vmatpush.bf16.msra.mxu0 %v345
    %380 = vmatpush.bf16.msra.mxu0 %v343
    %381 = vmatpush.bf16.msra.mxu0 %v341
    %382 = vmatpush.bf16.msra.mxu0 %v339
    %383 = vmatpush.bf16.msra.mxu0 %v337
    %384 = vmatpush.bf16.msra.mxu0 %v335
    %385 = vmatpush.bf16.msra.mxu0 %v333
    %386 = vmatmul.bf16.gmra.mxu0 %v282
    %v387 = vpop.f32.mrf.mxu0
    %v388 = vadd.f32 0.0, %v387
    %v389 = vpop.f32.mrf.mxu0
    %v390 = vadd.f32 0.0, %v389
    %391 = vdwg.mxu0
    %393 = vst [vmem:[#allocation1] ss:$9 sm:$0xff] %v211
    %s395 = scalar_lea.vmem [#allocation1], 1
    %396 = vst [vmem:[%s395] ss:$9 sm:$0xff] %v212
    %s398 = scalar_lea.vmem [#allocation1], 2
    %399 = vst [vmem:[%s398] ss:$9 sm:$0xff] %v213
    %s401 = scalar_lea.vmem [#allocation1], 3
    %402 = vst [vmem:[%s401] ss:$9 sm:$0xff] %v214
    %s404 = scalar_lea.vmem [#allocation1], 4
    %405 = vst [vmem:[%s404] ss:$9 sm:$0xff] %v215
    %s407 = scalar_lea.vmem [#allocation1], 5
    %408 = vst [vmem:[%s407] ss:$9 sm:$0xff] %v216
    %s410 = scalar_lea.vmem [#allocation1], 6
    %411 = vst [vmem:[%s410] ss:$9 sm:$0xff] %v217
    %s413 = scalar_lea.vmem [#allocation1], 7
    %414 = vst [vmem:[%s413] ss:$9 sm:$0xff] %v218
    %v415 = vld [vmem:[#allocation1] sm:$0xff]
    %v433 = vunpack.c.l.b16 %v219
    %v434 = vunpack.c.h.b16 %v219
    %v435 = vunpack.c.l.b16 %v220
    %v436 = vunpack.c.h.b16 %v220
    %v437 = vunpack.c.l.b16 %v221
    %v438 = vunpack.c.h.b16 %v221
    %v439 = vunpack.c.l.b16 %v222
    %v440 = vunpack.c.h.b16 %v222
    %v441 = vunpack.c.l.b16 %v223
    %v442 = vunpack.c.h.b16 %v223
    %v443 = vunpack.c.l.b16 %v224
    %v444 = vunpack.c.h.b16 %v224
    %v445 = vunpack.c.l.b16 %v225
    %v446 = vunpack.c.h.b16 %v225
    %v447 = vunpack.c.l.b16 %v226
    %v448 = vunpack.c.h.b16 %v226
    %v449 = vunpack.c.l.b16 %v227
    %v450 = vunpack.c.h.b16 %v227
    %v451 = vunpack.c.l.b16 %v228
    %v452 = vunpack.c.h.b16 %v228
    %v453 = vunpack.c.l.b16 %v229
    %v454 = vunpack.c.h.b16 %v229
    %v455 = vunpack.c.l.b16 %v230
    %v456 = vunpack.c.h.b16 %v230
    %v457 = vunpack.c.l.b16 %v231
    %v458 = vunpack.c.h.b16 %v231
    %v459 = vunpack.c.l.b16 %v232
    %v460 = vunpack.c.h.b16 %v232
    %v461 = vunpack.c.l.b16 %v233
    %v462 = vunpack.c.h.b16 %v233
    %v463 = vunpack.c.l.b16 %v234
    %v464 = vunpack.c.h.b16 %v234
    %v465 = vpack.c.b16 %v435, %v433
    %v466 = vpack.c.b16 %v436, %v434
    %v467 = vpack.c.b16 %v439, %v437
    %v468 = vpack.c.b16 %v440, %v438
    %v469 = vpack.c.b16 %v443, %v441
    %v470 = vpack.c.b16 %v444, %v442
    %v471 = vpack.c.b16 %v447, %v445
    %v472 = vpack.c.b16 %v448, %v446
    %v473 = vpack.c.b16 %v451, %v449
    %v474 = vpack.c.b16 %v452, %v450
    %v475 = vpack.c.b16 %v455, %v453
    %v476 = vpack.c.b16 %v456, %v454
    %v477 = vpack.c.b16 %v459, %v457
    %v478 = vpack.c.b16 %v460, %v458
    %v479 = vpack.c.b16 %v463, %v461
    %v480 = vpack.c.b16 %v464, %v462
    %497 = vmatpush.bf16.msra.mxu0 %v479
    %498 = vmatpush.bf16.msra.mxu0 %v477
    %499 = vmatpush.bf16.msra.mxu0 %v475
    %500 = vmatpush.bf16.msra.mxu0 %v473
    %501 = vmatpush.bf16.msra.mxu0 %v471
    %502 = vmatpush.bf16.msra.mxu0 %v469
    %503 = vmatpush.bf16.msra.mxu0 %v467
    %504 = vmatpush.bf16.msra.mxu0 %v465
    %505 = vmatmul.bf16.gmra.mxu0 %v415
    %v506 = vpop.f32.mrf.mxu0
    %v507 = vadd.f32 %v374, %v506
    %v508 = vpop.f32.mrf.mxu0
    %v509 = vadd.f32 %v376, %v508
    %510 = vdwg.mxu0
    %511 = vmatpush.bf16.msra.mxu0 %v480
    %512 = vmatpush.bf16.msra.mxu0 %v478
    %513 = vmatpush.bf16.msra.mxu0 %v476
    %514 = vmatpush.bf16.msra.mxu0 %v474
    %515 = vmatpush.bf16.msra.mxu0 %v472
    %516 = vmatpush.bf16.msra.mxu0 %v470
    %517 = vmatpush.bf16.msra.mxu0 %v468
    %518 = vmatpush.bf16.msra.mxu0 %v466
    %519 = vmatmul.bf16.gmra.mxu0 %v415
    %v520 = vpop.f32.mrf.mxu0
    %v521 = vadd.f32 %v388, %v520
    %v522 = vpop.f32.mrf.mxu0
    %v523 = vadd.f32 %v390, %v522
    %524 = vdwg.mxu0
    %v525 = vpack.c.bf16 %v209, %v207
    %v526 = vpack.c.bf16 %v210, %v208
    %v527 = vld [vmem:[%s7] sm:$0xff]
    %v528 = vld [vmem:[%s7 + $0x8] sm:$0xff]
    %v529 = vld [vmem:[%s7 + $0x10] sm:$0xff]
    %v530 = vld [vmem:[%s7 + $0x18] sm:$0xff]
    %v531 = vld [vmem:[%s7 + $0x20] sm:$0xff]
    %v532 = vld [vmem:[%s7 + $0x28] sm:$0xff]
    %v533 = vld [vmem:[%s7 + $0x30] sm:$0xff]
    %v534 = vld [vmem:[%s7 + $0x38] sm:$0xff]
    %v535 = vld [vmem:[%s7 + $0x40] sm:$0xff]
    %v536 = vld [vmem:[%s7 + $0x48] sm:$0xff]
    %v537 = vld [vmem:[%s7 + $0x50] sm:$0xff]
    %v538 = vld [vmem:[%s7 + $0x58] sm:$0xff]
    %v539 = vld [vmem:[%s7 + $0x60] sm:$0xff]
    %v540 = vld [vmem:[%s7 + $0x68] sm:$0xff]
    %v541 = vld [vmem:[%s7 + $0x70] sm:$0xff]
    %v542 = vld [vmem:[%s7 + $0x78] sm:$0xff]
    %v543 = vld [vmem:[%s7 + $0x80] sm:$0xff]
    %v544 = vld [vmem:[%s7 + $0x88] sm:$0xff]
    %v545 = vld [vmem:[%s7 + $0x90] sm:$0xff]
    %v546 = vld [vmem:[%s7 + $0x98] sm:$0xff]
    %v547 = vld [vmem:[%s7 + $0xa0] sm:$0xff]
    %v548 = vld [vmem:[%s7 + $0xa8] sm:$0xff]
    %v549 = vld [vmem:[%s7 + $0xb0] sm:$0xff]
    %v550 = vld [vmem:[%s7 + $0xb8] sm:$0xff]
    %v551 = vld [vmem:[%s7 + $0xc0] sm:$0xff]
    %v552 = vld [vmem:[%s7 + $0xc8] sm:$0xff]
    %v553 = vld [vmem:[%s7 + $0xd0] sm:$0xff]
    %v554 = vld [vmem:[%s7 + $0xd8] sm:$0xff]
    %v555 = vld [vmem:[%s7 + $0xe0] sm:$0xff]
    %v556 = vld [vmem:[%s7 + $0xe8] sm:$0xff]
    %v557 = vld [vmem:[%s7 + $0xf0] sm:$0xff]
    %v558 = vld [vmem:[%s7 + $0xf8] sm:$0xff]
    %v591 = vunpack.c.l.b16 %v527
    %v592 = vunpack.c.h.b16 %v527
    %v593 = vunpack.c.l.b16 %v528
    %v594 = vunpack.c.h.b16 %v528
    %v595 = vunpack.c.l.b16 %v529
    %v596 = vunpack.c.h.b16 %v529
    %v597 = vunpack.c.l.b16 %v530
    %v598 = vunpack.c.h.b16 %v530
    %v599 = vunpack.c.l.b16 %v531
    %v600 = vunpack.c.h.b16 %v531
    %v601 = vunpack.c.l.b16 %v532
    %v602 = vunpack.c.h.b16 %v532
    %v603 = vunpack.c.l.b16 %v533
    %v604 = vunpack.c.h.b16 %v533
    %v605 = vunpack.c.l.b16 %v534
    %v606 = vunpack.c.h.b16 %v534
    %v607 = vunpack.c.l.b16 %v535
    %v608 = vunpack.c.h.b16 %v535
    %v609 = vunpack.c.l.b16 %v536
    %v610 = vunpack.c.h.b16 %v536
    %v611 = vunpack.c.l.b16 %v537
    %v612 = vunpack.c.h.b16 %v537
    %v613 = vunpack.c.l.b16 %v538
    %v614 = vunpack.c.h.b16 %v538
    %v615 = vunpack.c.l.b16 %v539
    %v616 = vunpack.c.h.b16 %v539
    %v617 = vunpack.c.l.b16 %v540
    %v618 = vunpack.c.h.b16 %v540
    %v619 = vunpack.c.l.b16 %v541
    %v620 = vunpack.c.h.b16 %v541
    %v621 = vunpack.c.l.b16 %v542
    %v622 = vunpack.c.h.b16 %v542
    %v623 = vunpack.c.l.b16 %v543
    %v624 = vunpack.c.h.b16 %v543
    %v625 = vunpack.c.l.b16 %v544
    %v626 = vunpack.c.h.b16 %v544
    %v627 = vunpack.c.l.b16 %v545
    %v628 = vunpack.c.h.b16 %v545
    %v629 = vunpack.c.l.b16 %v546
    %v630 = vunpack.c.h.b16 %v546
    %v631 = vunpack.c.l.b16 %v547
    %v632 = vunpack.c.h.b16 %v547
    %v633 = vunpack.c.l.b16 %v548
    %v634 = vunpack.c.h.b16 %v548
    %v635 = vunpack.c.l.b16 %v549
    %v636 = vunpack.c.h.b16 %v549
    %v637 = vunpack.c.l.b16 %v550
    %v638 = vunpack.c.h.b16 %v550
    %v639 = vunpack.c.l.b16 %v551
    %v640 = vunpack.c.h.b16 %v551
    %v641 = vunpack.c.l.b16 %v552
    %v642 = vunpack.c.h.b16 %v552
    %v643 = vunpack.c.l.b16 %v553
    %v644 = vunpack.c.h.b16 %v553
    %v645 = vunpack.c.l.b16 %v554
    %v646 = vunpack.c.h.b16 %v554
    %v647 = vunpack.c.l.b16 %v555
    %v648 = vunpack.c.h.b16 %v555
    %v649 = vunpack.c.l.b16 %v556
    %v650 = vunpack.c.h.b16 %v556
    %v651 = vunpack.c.l.b16 %v557
    %v652 = vunpack.c.h.b16 %v557
    %v653 = vunpack.c.l.b16 %v558
    %v654 = vunpack.c.h.b16 %v558
    %v655 = vpack.c.b16 %v593, %v591
    %v656 = vpack.c.b16 %v594, %v592
    %v657 = vpack.c.b16 %v597, %v595
    %v658 = vpack.c.b16 %v598, %v596
    %v659 = vpack.c.b16 %v601, %v599
    %v660 = vpack.c.b16 %v602, %v600
    %v661 = vpack.c.b16 %v605, %v603
    %v662 = vpack.c.b16 %v606, %v604
    %v663 = vpack.c.b16 %v609, %v607
    %v664 = vpack.c.b16 %v610, %v608
    %v665 = vpack.c.b16 %v613, %v611
    %v666 = vpack.c.b16 %v614, %v612
    %v667 = vpack.c.b16 %v617, %v615
    %v668 = vpack.c.b16 %v618, %v616
    %v669 = vpack.c.b16 %v621, %v619
    %v670 = vpack.c.b16 %v622, %v620
    %v671 = vpack.c.b16 %v625, %v623
    %v672 = vpack.c.b16 %v626, %v624
    %v673 = vpack.c.b16 %v629, %v627
    %v674 = vpack.c.b16 %v630, %v628
    %v675 = vpack.c.b16 %v633, %v631
    %v676 = vpack.c.b16 %v634, %v632
    %v677 = vpack.c.b16 %v637, %v635
    %v678 = vpack.c.b16 %v638, %v636
    %v679 = vpack.c.b16 %v641, %v639
    %v680 = vpack.c.b16 %v642, %v640
    %v681 = vpack.c.b16 %v645, %v643
    %v682 = vpack.c.b16 %v646, %v644
    %v683 = vpack.c.b16 %v649, %v647
    %v684 = vpack.c.b16 %v650, %v648
    %v685 = vpack.c.b16 %v653, %v651
    %v686 = vpack.c.b16 %v654, %v652
    %719 = vmatpush.bf16.msra.mxu0 %v669
    %720 = vmatpush.bf16.msra.mxu0 %v667
    %721 = vmatpush.bf16.msra.mxu0 %v665
    %722 = vmatpush.bf16.msra.mxu0 %v663
    %723 = vmatpush.bf16.msra.mxu0 %v661
    %724 = vmatpush.bf16.msra.mxu0 %v659
    %725 = vmatpush.bf16.msra.mxu0 %v657
    %726 = vmatpush.bf16.msra.mxu0 %v655
    %727 = vmatmul.bf16.gmra.mxu0 %v525
    %v728 = vpop.f32.mrf.mxu0
    %v729 = vadd.f32 0.0, %v728
    %v730 = vpop.f32.mrf.mxu0
    %v731 = vadd.f32 0.0, %v730
    %732 = vdwg.mxu0
    %733 = vmatpush.bf16.msra.mxu0 %v685
    %734 = vmatpush.bf16.msra.mxu0 %v683
    %735 = vmatpush.bf16.msra.mxu0 %v681
    %736 = vmatpush.bf16.msra.mxu0 %v679
    %737 = vmatpush.bf16.msra.mxu0 %v677
    %738 = vmatpush.bf16.msra.mxu0 %v675
    %739 = vmatpush.bf16.msra.mxu0 %v673
    %740 = vmatpush.bf16.msra.mxu0 %v671
    %741 = vmatmul.bf16.gmra.mxu0 %v526
    %v742 = vpop.f32.mrf.mxu0
    %v743 = vadd.f32 %v729, %v742
    %v744 = vpop.f32.mrf.mxu0
    %v745 = vadd.f32 %v731, %v744
    %746 = vdwg.mxu0
    %747 = vmatpush.bf16.msra.mxu0 %v670
    %748 = vmatpush.bf16.msra.mxu0 %v668
    %749 = vmatpush.bf16.msra.mxu0 %v666
    %750 = vmatpush.bf16.msra.mxu0 %v664
    %751 = vmatpush.bf16.msra.mxu0 %v662
    %752 = vmatpush.bf16.msra.mxu0 %v660
    %753 = vmatpush.bf16.msra.mxu0 %v658
    %754 = vmatpush.bf16.msra.mxu0 %v656
    %755 = vmatmul.bf16.gmra.mxu0 %v525
    %v756 = vpop.f32.mrf.mxu0
    %v757 = vadd.f32 0.0, %v756
    %v758 = vpop.f32.mrf.mxu0
    %v759 = vadd.f32 0.0, %v758
    %760 = vdwg.mxu0
    %761 = vmatpush.bf16.msra.mxu0 %v686
    %762 = vmatpush.bf16.msra.mxu0 %v684
    %763 = vmatpush.bf16.msra.mxu0 %v682
    %764 = vmatpush.bf16.msra.mxu0 %v680
    %765 = vmatpush.bf16.msra.mxu0 %v678
    %766 = vmatpush.bf16.msra.mxu0 %v676
    %767 = vmatpush.bf16.msra.mxu0 %v674
    %768 = vmatpush.bf16.msra.mxu0 %v672
    %769 = vmatmul.bf16.gmra.mxu0 %v526
    %v770 = vpop.f32.mrf.mxu0
    %v771 = vadd.f32 %v757, %v770
    %v772 = vpop.f32.mrf.mxu0
    %v773 = vadd.f32 %v759, %v772
    %774 = vdwg.mxu0
    %v775 = vadd.f32 %v507, %v743
    %v776 = vadd.f32 %v521, %v771
    %v777 = vadd.f32 %v509, %v745
    %v778 = vadd.f32 %v523, %v773
    %v779 = vld [vmem:[%s8] sm:$0x3]
    %v781 = vperm.slane %v779, 0
    %v782 = vperm.slane %v779, 1
    %v785 = vadd.f32 %v775, %v781
    %v786 = vadd.f32 %v776, %v782
    %v787 = vadd.f32 %v777, %v781
    %v788 = vadd.f32 %v778, %v782
    %v789 = vmax.f32 %v785, 0.0
    %v790 = vmax.f32 %v786, 0.0
    %v791 = vmax.f32 %v787, 0.0
    %v792 = vmax.f32 %v788, 0.0
    %v793 = vpack.c.bf16 %v791, %v789
    %v794 = vpack.c.bf16 %v792, %v790
    %v795 = vld [vmem:[%s9] sm:$0xff]
    %v796 = vld [vmem:[%s9 + $0x8] sm:$0xff]
    %v797 = vld [vmem:[%s9 + $0x10] sm:$0xff]
    %v798 = vld [vmem:[%s9 + $0x18] sm:$0xff]
    %v799 = vld [vmem:[%s9 + $0x20] sm:$0xff]
    %v800 = vld [vmem:[%s9 + $0x28] sm:$0xff]
    %v801 = vld [vmem:[%s9 + $0x30] sm:$0xff]
    %v802 = vld [vmem:[%s9 + $0x38] sm:$0xff]
    %v803 = vld [vmem:[%s9 + $0x40] sm:$0xff]
    %v804 = vld [vmem:[%s9 + $0x48] sm:$0xff]
    %v805 = vld [vmem:[%s9 + $0x50] sm:$0xff]
    %v806 = vld [vmem:[%s9 + $0x58] sm:$0xff]
    %v807 = vld [vmem:[%s9 + $0x60] sm:$0xff]
    %v808 = vld [vmem:[%s9 + $0x68] sm:$0xff]
    %v809 = vld [vmem:[%s9 + $0x70] sm:$0xff]
    %v810 = vld [vmem:[%s9 + $0x78] sm:$0xff]
    %v811 = vld [vmem:[%s9 + $0x80] sm:$0xff]
    %v812 = vld [vmem:[%s9 + $0x88] sm:$0xff]
    %v813 = vld [vmem:[%s9 + $0x90] sm:$0xff]
    %v814 = vld [vmem:[%s9 + $0x98] sm:$0xff]
    %v815 = vld [vmem:[%s9 + $0xa0] sm:$0xff]
    %v816 = vld [vmem:[%s9 + $0xa8] sm:$0xff]
    %v817 = vld [vmem:[%s9 + $0xb0] sm:$0xff]
    %v818 = vld [vmem:[%s9 + $0xb8] sm:$0xff]
    %v819 = vld [vmem:[%s9 + $0xc0] sm:$0xff]
    %v820 = vld [vmem:[%s9 + $0xc8] sm:$0xff]
    %v821 = vld [vmem:[%s9 + $0xd0] sm:$0xff]
    %v822 = vld [vmem:[%s9 + $0xd8] sm:$0xff]
    %v823 = vld [vmem:[%s9 + $0xe0] sm:$0xff]
    %v824 = vld [vmem:[%s9 + $0xe8] sm:$0xff]
    %v825 = vld [vmem:[%s9 + $0xf0] sm:$0xff]
    %v826 = vld [vmem:[%s9 + $0xf8] sm:$0xff]
    %v827 = vld [vmem:[%s10] sm:$0x3]
    %v829 = vperm.slane %v827, 0
    %v830 = vperm.slane %v827, 1
    %v865 = vunpack.c.l.b16 %v795
    %v866 = vunpack.c.h.b16 %v795
    %v867 = vunpack.c.l.b16 %v796
    %v868 = vunpack.c.h.b16 %v796
    %v869 = vunpack.c.l.b16 %v797
    %v870 = vunpack.c.h.b16 %v797
    %v871 = vunpack.c.l.b16 %v798
    %v872 = vunpack.c.h.b16 %v798
    %v873 = vunpack.c.l.b16 %v799
    %v874 = vunpack.c.h.b16 %v799
    %v875 = vunpack.c.l.b16 %v800
    %v876 = vunpack.c.h.b16 %v800
    %v877 = vunpack.c.l.b16 %v801
    %v878 = vunpack.c.h.b16 %v801
    %v879 = vunpack.c.l.b16 %v802
    %v880 = vunpack.c.h.b16 %v802
    %v881 = vunpack.c.l.b16 %v803
    %v882 = vunpack.c.h.b16 %v803
    %v883 = vunpack.c.l.b16 %v804
    %v884 = vunpack.c.h.b16 %v804
    %v885 = vunpack.c.l.b16 %v805
    %v886 = vunpack.c.h.b16 %v805
    %v887 = vunpack.c.l.b16 %v806
    %v888 = vunpack.c.h.b16 %v806
    %v889 = vunpack.c.l.b16 %v807
    %v890 = vunpack.c.h.b16 %v807
    %v891 = vunpack.c.l.b16 %v808
    %v892 = vunpack.c.h.b16 %v808
    %v893 = vunpack.c.l.b16 %v809
    %v894 = vunpack.c.h.b16 %v809
    %v895 = vunpack.c.l.b16 %v810
    %v896 = vunpack.c.h.b16 %v810
    %v897 = vunpack.c.l.b16 %v811
    %v898 = vunpack.c.h.b16 %v811
    %v899 = vunpack.c.l.b16 %v812
    %v900 = vunpack.c.h.b16 %v812
    %v901 = vunpack.c.l.b16 %v813
    %v902 = vunpack.c.h.b16 %v813
    %v903 = vunpack.c.l.b16 %v814
    %v904 = vunpack.c.h.b16 %v814
    %v905 = vunpack.c.l.b16 %v815
    %v906 = vunpack.c.h.b16 %v815
    %v907 = vunpack.c.l.b16 %v816
    %v908 = vunpack.c.h.b16 %v816
    %v909 = vunpack.c.l.b16 %v817
    %v910 = vunpack.c.h.b16 %v817
    %v911 = vunpack.c.l.b16 %v818
    %v912 = vunpack.c.h.b16 %v818
    %v913 = vunpack.c.l.b16 %v819
    %v914 = vunpack.c.h.b16 %v819
    %v915 = vunpack.c.l.b16 %v820
    %v916 = vunpack.c.h.b16 %v820
    %v917 = vunpack.c.l.b16 %v821
    %v918 = vunpack.c.h.b16 %v821
    %v919 = vunpack.c.l.b16 %v822
    %v920 = vunpack.c.h.b16 %v822
    %v921 = vunpack.c.l.b16 %v823
    %v922 = vunpack.c.h.b16 %v823
    %v923 = vunpack.c.l.b16 %v824
    %v924 = vunpack.c.h.b16 %v824
    %v925 = vunpack.c.l.b16 %v825
    %v926 = vunpack.c.h.b16 %v825
    %v927 = vunpack.c.l.b16 %v826
    %v928 = vunpack.c.h.b16 %v826
    %v929 = vpack.c.b16 %v867, %v865
    %v930 = vpack.c.b16 %v868, %v866
    %v931 = vpack.c.b16 %v871, %v869
    %v932 = vpack.c.b16 %v872, %v870
    %v933 = vpack.c.b16 %v875, %v873
    %v934 = vpack.c.b16 %v876, %v874
    %v935 = vpack.c.b16 %v879, %v877
    %v936 = vpack.c.b16 %v880, %v878
    %v937 = vpack.c.b16 %v883, %v881
    %v938 = vpack.c.b16 %v884, %v882
    %v939 = vpack.c.b16 %v887, %v885
    %v940 = vpack.c.b16 %v888, %v886
    %v941 = vpack.c.b16 %v891, %v889
    %v942 = vpack.c.b16 %v892, %v890
    %v943 = vpack.c.b16 %v895, %v893
    %v944 = vpack.c.b16 %v896, %v894
    %v945 = vpack.c.b16 %v899, %v897
    %v946 = vpack.c.b16 %v900, %v898
    %v947 = vpack.c.b16 %v903, %v901
    %v948 = vpack.c.b16 %v904, %v902
    %v949 = vpack.c.b16 %v907, %v905
    %v950 = vpack.c.b16 %v908, %v906
    %v951 = vpack.c.b16 %v911, %v909
    %v952 = vpack.c.b16 %v912, %v910
    %v953 = vpack.c.b16 %v915, %v913
    %v954 = vpack.c.b16 %v916, %v914
    %v955 = vpack.c.b16 %v919, %v917
    %v956 = vpack.c.b16 %v920, %v918
    %v957 = vpack.c.b16 %v923, %v921
    %v958 = vpack.c.b16 %v924, %v922
    %v959 = vpack.c.b16 %v927, %v925
    %v960 = vpack.c.b16 %v928, %v926
    %993 = vmatpush.bf16.msra.mxu0 %v943
    %994 = vmatpush.bf16.msra.mxu0 %v941
    %995 = vmatpush.bf16.msra.mxu0 %v939
    %996 = vmatpush.bf16.msra.mxu0 %v937
    %997 = vmatpush.bf16.msra.mxu0 %v935
    %998 = vmatpush.bf16.msra.mxu0 %v933
    %999 = vmatpush.bf16.msra.mxu0 %v931
    %1000 = vmatpush.bf16.msra.mxu0 %v929
    %1001 = vmatmul.bf16.gmra.mxu0 %v793
    %v1002 = vpop.f32.mrf.mxu0
    %v1003 = vadd.f32 %v829, %v1002
    %v1004 = vpop.f32.mrf.mxu0
    %v1005 = vadd.f32 %v829, %v1004
    %1006 = vdwg.mxu0
    %1007 = vmatpush.bf16.msra.mxu0 %v959
    %1008 = vmatpush.bf16.msra.mxu0 %v957
    %1009 = vmatpush.bf16.msra.mxu0 %v955
    %1010 = vmatpush.bf16.msra.mxu0 %v953
    %1011 = vmatpush.bf16.msra.mxu0 %v951
    %1012 = vmatpush.bf16.msra.mxu0 %v949
    %1013 = vmatpush.bf16.msra.mxu0 %v947
    %1014 = vmatpush.bf16.msra.mxu0 %v945
    %1015 = vmatmul.bf16.gmra.mxu0 %v794
    %v1016 = vpop.f32.mrf.mxu0
    %v1017 = vadd.f32 %v1003, %v1016
    %v1018 = vpop.f32.mrf.mxu0
    %v1019 = vadd.f32 %v1005, %v1018
    %1020 = vdwg.mxu0
    %1021 = vmatpush.bf16.msra.mxu0 %v944
    %1022 = vmatpush.bf16.msra.mxu0 %v942
    %1023 = vmatpush.bf16.msra.mxu0 %v940
    %1024 = vmatpush.bf16.msra.mxu0 %v938
    %1025 = vmatpush.bf16.msra.mxu0 %v936
    %1026 = vmatpush.bf16.msra.mxu0 %v934
    %1027 = vmatpush.bf16.msra.mxu0 %v932
    %1028 = vmatpush.bf16.msra.mxu0 %v930
    %1029 = vmatmul.bf16.gmra.mxu0 %v793
    %v1030 = vpop.f32.mrf.mxu0
    %v1031 = vadd.f32 %v830, %v1030
    %v1032 = vpop.f32.mrf.mxu0
    %v1033 = vadd.f32 %v830, %v1032
    %1034 = vdwg.mxu0
    %1035 = vmatpush.bf16.msra.mxu0 %v960
    %1036 = vmatpush.bf16.msra.mxu0 %v958
    %1037 = vmatpush.bf16.msra.mxu0 %v956
    %1038 = vmatpush.bf16.msra.mxu0 %v954
    %1039 = vmatpush.bf16.msra.mxu0 %v952
    %1040 = vmatpush.bf16.msra.mxu0 %v950
    %1041 = vmatpush.bf16.msra.mxu0 %v948
    %1042 = vmatpush.bf16.msra.mxu0 %v946
    %1043 = vmatmul.bf16.gmra.mxu0 %v794
    %v1044 = vpop.f32.mrf.mxu0
    %v1045 = vadd.f32 %v1031, %v1044
    %v1046 = vpop.f32.mrf.mxu0
    %v1047 = vadd.f32 %v1033, %v1046
    %1048 = vdwg.mxu0
    %v1049 = vld [vmem:[%s11] sm:$0x3]
    %v1051 = vperm.slane %v1049, 0
    %v1052 = vperm.slane %v1049, 1
    %v1055 = vmul.f32 %v1017, %v1051
    %v1056 = vmul.f32 %v1045, %v1052
    %v1057 = vmul.f32 %v1019, %v1051
    %v1058 = vmul.f32 %v1047, %v1052
    %v1059 = vadd.f32 %v1055, %v1056
    %1060 = vadd.xlane.f32.xlu0 %v1059
    %v1061 = vpop.xlane.xlu0 %1060
    %v1062 = vadd.f32 %v1057, %v1058
    %1063 = vadd.xlane.f32.xlu0 %v1062
    %v1064 = vpop.xlane.xlu0 %1063
    %v1065 = vrcp.pop %v1061
    %v1066 = vrcp.pop %v1064
    %v1067 = vld [vmem:[%s12] sm:$0x3]
    %vm1068 = vcmp.gt.f32.partialorder %v1067, 0.0
    %v1069 = vmul.f32 %v1055, %v1065
    %v1070 = vmul.f32 %v1056, %v1065
    %v1071 = vmul.f32 %v1057, %v1066
    %v1072 = vmul.f32 %v1058, %v1066
    %v1073 = vsel %vm1068, 1, 0
    %v1074 = vperm.slane %v1073, 0
    %v1075 = vperm.slane %v1073, 1
    %vm1076 = vcmp.eq.s32.totalorder %v1074, 1
    %vm1077 = vcmp.eq.s32.totalorder %v1075, 1
    %v1078 = vsel %vm1076, %v1069, %v1017
    %v1079 = vsel %vm1077, %v1070, %v1045
    %v1080 = vsel %vm1076, %v1071, %v1019
    %v1081 = vsel %vm1077, %v1072, %v1047
    %v1086 = vrot.slane %v1079, 6
    %v1087 = vrot.slane %v1081, 6
    %vm1088 = vcmask 1041408
    %v1089 = vsel %vm1088, %v1078, %v1086
    %vm1090 = vcmask 1043458
    %v1091 = vsel %vm1090, %v1078, %v1086
    %v1092 = vrot.slane %v1091, 2
    %vm1093 = vcmask 1045508
    %v1094 = vsel %vm1093, %v1078, %v1086
    %v1095 = vrot.slane %v1094, 4
    %vm1096 = vcmask 1045504
    %v1097 = vsel %vm1096, %v1086, %v1078
    %v1098 = vrot.slane %v1097, 6
    %v1099 = vsel %vm1088, %v1080, %v1087
    %v1100 = vsel %vm1090, %v1080, %v1087
    %v1101 = vrot.slane %v1100, 2
    %v1102 = vsel %vm1093, %v1080, %v1087
    %v1103 = vrot.slane %v1102, 4
    %v1104 = vsel %vm1096, %v1087, %v1080
    %v1105 = vrot.slane %v1104, 6
    %1114 = vst [vmem:[#allocation2] sm:$0xf] %v1089
    %1115 = vst [vmem:[#allocation2 + $0x4] sm:$0xf] %v1092
    %1116 = vst [vmem:[#allocation2 + $0x8] sm:$0xf] %v1095
    %1117 = vst [vmem:[#allocation2 + $0xc] sm:$0xf] %v1098
    %1118 = vst [vmem:[#allocation2 + $0x10] sm:$0xf] %v1099
    %1119 = vst [vmem:[#allocation2 + $0x14] sm:$0xf] %v1101
    %1120 = vst [vmem:[#allocation2 + $0x18] sm:$0xf] %v1103
    %1121 = vst [vmem:[#allocation2 + $0x1c] sm:$0xf] %v1105
    // Predicated region
    $region54: #{forward.5} parent=1 // pred_check
      _
    $region55: #{forward.5} parent=1 // pred_check_branch
      %1123 = sbr.rel (0) target = $region57
    $region56: #{forward.5} parent=1 // pred_region
      // Predicated region
      $region58: #{forward.5} parent=56 // pred_check
        _
      $region59: #{forward.5} parent=56 // pred_check_branch
        %1125 = sbr.rel (0) target = $region61
      $region60: #{forward.5} parent=56 // pred_region
        // Predicated region
        $region62: #{forward.5} parent=60 // pred_check
          _
        $region63: #{forward.5} parent=60 // pred_check_branch
          %1127 = sbr.rel target = $region65
        $region64: #{forward.5} parent=60 // pred_region
          // Predicated region
          $region77: #{forward.5} parent=64 // pred_check
            _
          $region78: #{forward.5} parent=64 // pred_check_branch
            %1143 = sbr.rel (0) target = $region80
          $region79: #{forward.5} parent=64 // pred_region
            %s1145 = ssub.s32 16, 1
            loop: start=0, step=1, limit=1
            $region81: #{forward.5} parent=79 // loop_pre_header
              _
            $region82: #{forward.5} parent=79 // loop_header
              %s1147 = sphi 0, %s1151
              %p1148 = scmp.ge.s32.totalorder %s1147, 1
              %s1152 = sphi [#allocation2], [#allocation2]
              %s1153 = sphi %s13, %s13
            $region83: #{forward.5} parent=79 // loop_header_branch
              %1150 = sbr.rel (%p1148) target = $region87
            $region84: #{forward.5} parent=79 // loop_body
              %v1154 = vld [vmem:[%s1152] sm:%s1145]
              %1155 = vst [vmem:[%s1153] sm:%s1145] %v1154
            $region85: #{forward.5} parent=79 // loop_footer
              %s1151 = sadd.s32 1, %s1147
            $region86: #{forward.5} parent=79 // loop_footer_branch
              %1146 = sbr.rel target = $region82
            $region87: #{forward.5} parent=79 // loop_exit
              _
          $region80: #{forward.5} parent=64 // pred_fallthru
            _
        $region65: #{forward.5} parent=60 // pred_fallthru
          _
        // Predicated region
        $region66: #{forward.5} parent=60 // pred_check
          _
        $region67: #{forward.5} parent=60 // pred_check_branch
          %1129 = sbr.rel (0) target = $region69
        $region68: #{forward.5} parent=60 // pred_region
          %s1131 = ssub.s32 16, 1
          loop: start=0, step=1, limit=1
          $region70: #{forward.5} parent=68 // loop_pre_header
            _
          $region71: #{forward.5} parent=68 // loop_header
            %s1133 = sphi 0, %s1137
            %p1134 = scmp.ge.s32.totalorder %s1133, 1
            %s1138 = sphi [#allocation2], [#allocation2]
            %s1139 = sphi %s13, %s13
          $region72: #{forward.5} parent=68 // loop_header_branch
            %1136 = sbr.rel (%p1134) target = $region76
          $region73: #{forward.5} parent=68 // loop_body
            %v1140 = vld [vmem:[%s1138] sm:%s1131]
            %1141 = vst [vmem:[%s1139] sm:%s1131] %v1140
          $region74: #{forward.5} parent=68 // loop_footer
            %s1137 = sadd.s32 1, %s1133
          $region75: #{forward.5} parent=68 // loop_footer_branch
            %1132 = sbr.rel target = $region71
          $region76: #{forward.5} parent=68 // loop_exit
            _
        $region69: #{forward.5} parent=60 // pred_fallthru
          _
      $region61: #{forward.5} parent=56 // pred_fallthru
        _
      %1156 = vnop
    $region57: #{forward.5} parent=1 // pred_fallthru
      _
    // Predicated region
    $region88: #{forward.5} parent=1 // pred_check
      _
    $region89: #{forward.5} parent=1 // pred_check_branch
      %1158 = sbr.rel (0) target = $region91
    $region90: #{forward.5} parent=1 // pred_region
      _
    $region91: #{forward.5} parent=1 // pred_fallthru
      _

</llo_original>
